<compile_context>
chip_gen: v7x
topology: tpu7x:2x2x1
jax: 0.10.0
libtpu: 0.0.40
codegen_flags: <defaults>
</compile_context>

<pallas_src>
import functools

import jax
import jax.numpy as jnp
import numpy as np
from jax.experimental import pallas as pl
from jax.experimental.pallas import tpu as pltpu


def _frequency_fusion_kernel(x_ref, w1_ref, b1_ref, bm_ref, we_ref, wo_ref,
                             bdw_ref, pe_ref, po_ref, o_ref, *, H, W, HWp, dim):
    h = dim // 2

    # 1x1 conv: single (dim, Cin) @ (Cin, HWp) bf16 MXU matmul, f32 accumulate.
    x = x_ref[...].astype(jnp.bfloat16)                             # (Cin, HWp)
    conv11 = jnp.dot(w1_ref[...], x,
                     preferred_element_type=jnp.float32) + b1_ref[...]   # (dim, HWp)

    # Base border-validity rows (1, HWp): top/bottom/left/right neighbor exists.
    bm = bm_ref[...]
    top, bot, left, right = bm[0:1], bm[1:2], bm[2:3], bm[3:4]

    we = we_ref[...]                                                # (dim, 9)
    wo = wo_ref[...]                                                # (dim, 9)

    # 3x3 depthwise conv as 9 shifted MACs on the flattened spatial axis.
    # F_e / F_o accumulate the even / odd parity output channels (see wrapper).
    f_e = jnp.zeros((dim, HWp), jnp.float32)
    f_o = jnp.zeros((dim, HWp), jnp.float32)
    for k in range(9):
        dy = k // 3 - 1
        dx = k % 3 - 1
        t = dy * W + dx                                             # flat-index offset
        shifted = conv11 if t == 0 else pltpu.roll(conv11, (-t) % HWp, 1)
        m = None
        if dy == -1:
            m = top
        elif dy == 1:
            m = bot
        if dx == -1:
            m = left if m is None else m * left
        elif dx == 1:
            m = right if m is None else m * right
        masked = shifted if m is None else shifted * m              # shared by both accs
        f_e = f_e + we[:, k:k + 1] * masked
        f_o = f_o + wo[:, k:k + 1] * masked

    # Recover d1 / d2 in natural channel order with 0/1 permutation matmuls
    # (row routing on the idle MXU; avoids any sublane interleave/relayout).
    pe = pe_ref[...]                                                # (dim, h)
    po = po_ref[...]                                                # (dim, h)
    bdw = bdw_ref[...]                                              # (2*dim, 1)
    d1 = (jnp.dot(pe, f_e[:h], preferred_element_type=jnp.float32)
          + jnp.dot(po, f_o[:h], preferred_element_type=jnp.float32)
          + bdw[:dim])                                              # (dim, HWp)
    d2 = (jnp.dot(pe, f_e[h:], preferred_element_type=jnp.float32)
          + jnp.dot(po, f_o[h:], preferred_element_type=jnp.float32)
          + bdw[dim:])                                              # (dim, HWp)

    # Per-pixel softmax over channels (sublane axis); divide via EUP approx recip.
    mx = jnp.max(d1, axis=0, keepdims=True)
    e = jnp.exp(d1 - mx)
    z = jnp.sum(e, axis=0, keepdims=True)
    att = e * pl.reciprocal(z, approx=True)

    o_ref[...] = (att * conv11 + d2).astype(o_ref.dtype)


def frequency_fusion_forward(feature1, feature2, feature3, w1, b1, wdw, bdw):
    """feature*: (B, in_c, H, W); w1: (dim, 3*in_c); b1: (dim,);
    wdw: (2*dim, 1, 3, 3) PyTorch grouped-conv weight; bdw: (2*dim,)."""
    B, in_c, H, W = feature1.shape
    Cin = 3 * in_c
    dim = w1.shape[0]
    assert dim % 2 == 0, "parity-split depthwise scheme needs even dim"
    h = dim // 2
    HW = H * W
    HWp = ((HW + 127) // 128) * 128        # lane-dense blocks for arbitrary H, W

    # NCHW -> (B, C, HW): pure reshape after the channel concat, no transposes.
    x = jnp.concatenate([feature1, feature2, feature3], axis=1).reshape(B, Cin, HW)
    x = x.astype(jnp.float32)
    if HWp != HW:
        x = jnp.pad(x, ((0, 0), (0, 0), (0, HWp - HW)))

    # 1x1 conv weights in bf16 (single-pass MXU), bias in f32.
    w1_bf = w1.astype(jnp.bfloat16)                                 # (dim, Cin)
    b1_2d = b1.astype(jnp.float32)[:, None]                         # (dim, 1)

    # Grouped-conv weights regrouped by output-channel parity.
    # Output channel o reads input channel o//2; d1 = outputs [0,dim), d2 = [dim,2dim).
    # F_e row r (< h)  -> d1[2r]        (reads conv11[r])        weight wdw[2r]
    # F_e row r (>= h) -> d2[2(r-h)]    (reads conv11[h + (r-h)]) weight wdw[dim+2(r-h)]
    # F_o analogously for the odd outputs.
    wdw9 = wdw.reshape(2 * dim, 9).astype(jnp.float32)
    we = jnp.concatenate([wdw9[0:dim:2], wdw9[dim::2]], axis=0)     # (dim, 9)
    wo = jnp.concatenate([wdw9[1:dim:2], wdw9[dim + 1::2]], axis=0) # (dim, 9)
    bdw_2d = bdw.astype(jnp.float32)[:, None]                       # (2*dim, 1)

    # Permutation matrices routing parity rows back to natural channel order.
    pe_np = np.zeros((dim, h), np.float32)
    po_np = np.zeros((dim, h), np.float32)
    pe_np[2 * np.arange(h), np.arange(h)] = 1.0
    po_np[2 * np.arange(h) + 1, np.arange(h)] = 1.0
    pe = jnp.asarray(pe_np)
    po = jnp.asarray(po_np)

    # 4 base border-validity rows (top/bottom/left/right neighbor exists).
    ys, xs = np.divmod(np.arange(HW), W)
    bm_np = np.zeros((4, HWp), np.float32)
    bm_np[0, :HW] = ys >= 1
    bm_np[1, :HW] = ys <= H - 2
    bm_np[2, :HW] = xs >= 1
    bm_np[3, :HW] = xs <= W - 2
    bm = jnp.asarray(bm_np)

    kernel = functools.partial(_frequency_fusion_kernel, H=H, W=W, HWp=HWp, dim=dim)

    flops = B * (2 * dim * Cin * HWp          # 1x1 matmul
                 + 4 * dim * 9 * HWp          # depthwise 9-tap MACs (2 accumulators)
                 + 8 * dim * h * HWp          # permutation recombination dots
                 + 12 * dim * HWp)            # softmax + fuse elementwise
    bytes_accessed = (4 * (B * Cin * HWp + B * dim * HWp)
                      + 2 * w1.size
                      + 4 * (b1.size + bdw.size + 18 * dim + 4 * HWp + 2 * dim * h))

    out = pl.pallas_call(
        kernel,
        out_shape=jax.ShapeDtypeStruct((B, dim, HWp), jnp.float32),
        grid_spec=pltpu.PrefetchScalarGridSpec(
            num_scalar_prefetch=0,
            grid=(B,),
            in_specs=[
                pl.BlockSpec((pl.Squeezed(), Cin, HWp), lambda b: (b, 0, 0)),
                pl.BlockSpec((dim, Cin), lambda b: (0, 0)),
                pl.BlockSpec((dim, 1), lambda b: (0, 0)),
                pl.BlockSpec((4, HWp), lambda b: (0, 0)),
                pl.BlockSpec((dim, 9), lambda b: (0, 0)),
                pl.BlockSpec((dim, 9), lambda b: (0, 0)),
                pl.BlockSpec((2 * dim, 1), lambda b: (0, 0)),
                pl.BlockSpec((dim, h), lambda b: (0, 0)),
                pl.BlockSpec((dim, h), lambda b: (0, 0)),
            ],
            out_specs=pl.BlockSpec((pl.Squeezed(), dim, HWp), lambda b: (b, 0, 0)),
        ),
        compiler_params=pltpu.CompilerParams(
            dimension_semantics=("parallel",),
            vmem_limit_bytes=48 * 1024 * 1024),
        cost_estimate=pl.CostEstimate(
            flops=flops, transcendentals=B * dim * HWp,
            bytes_accessed=bytes_accessed),
    )(x, w1_bf, b1_2d, bm, we, wo, bdw_2d, pe, po)

    if HWp != HW:
        out = out[:, :, :HW]
    return out.reshape(B, dim, H, W)


def frequency_fusion_reference(feature1, feature2, feature3, w1, b1, wdw, bdw):
    """Pure-JAX reference mirroring the PyTorch forward (NCHW)."""
    dim = w1.shape[0]
    concat = jnp.concatenate([feature1, feature2, feature3], axis=1)
    conv11 = jnp.einsum('oi,bihw->bohw', w1, concat,
                        precision=jax.lax.Precision.HIGHEST) + b1[None, :, None, None]
    dw = jax.lax.conv_general_dilated(
        conv11, wdw, window_strides=(1, 1), padding=((1, 1), (1, 1)),
        dimension_numbers=('NCHW', 'OIHW', 'NCHW'),
        feature_group_count=dim,
        precision=jax.lax.Precision.HIGHEST) + bdw[None, :, None, None]
    d1, d2 = dw[:, :dim], dw[:, dim:]
    b, c, h, w = d1.shape
    att = jax.nn.softmax(d1.reshape(b, c, h * w), axis=1).reshape(b, c, h, w)
    return att * conv11 + d2


if __name__ == "__main__":
    # Module defaults: in_c=3, dim=48; small spatial extent for the demo.
    B, in_c, H, W = 2, 3, 16, 16
    dim = 48

    key = jax.random.PRNGKey(0)
    ks = jax.random.split(key, 7)
    f1 = jax.random.normal(ks[0], (B, in_c, H, W), jnp.float32)
    f2 = jax.random.normal(ks[1], (B, in_c, H, W), jnp.float32)
    f3 = jax.random.normal(ks[2], (B, in_c, H, W), jnp.float32)
    # conv11: Conv2d(3*in_c, dim, 1) -> weight (dim, 3*in_c, 1, 1), stored as (dim, 3*in_c)
    w1 = 0.2 * jax.random.normal(ks[3], (dim, 3 * in_c), jnp.float32)
    b1 = 0.1 * jax.random.normal(ks[4], (dim,), jnp.float32)
    # dwconv: Conv2d(dim, 2*dim, 3, padding=1, groups=dim) -> weight (2*dim, 1, 3, 3)
    wdw = 0.2 * jax.random.normal(ks[5], (2 * dim, 1, 3, 3), jnp.float32)
    bdw = 0.1 * jax.random.normal(ks[6], (2 * dim,), jnp.float32)

    out = frequency_fusion_forward(f1, f2, f3, w1, b1, wdw, bdw)
    out = jax.block_until_ready(out)

    ref = frequency_fusion_reference(f1, f2, f3, w1, b1, wdw, bdw)
    assert out.shape == (B, dim, H, W)
    # Tolerance absorbs the single-pass bf16 MXU matmul + approx reciprocal vs the
    # HIGHEST-precision XLA reference; genuine semantic bugs show up as O(0.1) diffs.
    assert jnp.allclose(out, ref, rtol=2e-2, atol=2e-2), \
        "Pallas Frequency_fusion mismatch vs reference"
    print("KERNEL_OK")
</pallas_src>

<mosaic_0001>
module attributes {stable_mosaic.version = 11 : i64} {
  func.func @_frequency_fusion_kernel(%arg0: i32, %arg1: memref<1x9x256xf32, #tpu.memory_space<vmem>>, %arg2: memref<48x9xbf16, #tpu.memory_space<vmem>>, %arg3: memref<48x1xf32, #tpu.memory_space<vmem>>, %arg4: memref<4x256xf32, #tpu.memory_space<vmem>>, %arg5: memref<48x9xf32, #tpu.memory_space<vmem>>, %arg6: memref<48x9xf32, #tpu.memory_space<vmem>>, %arg7: memref<96x1xf32, #tpu.memory_space<vmem>>, %arg8: memref<48x24xf32, #tpu.memory_space<vmem>>, %arg9: memref<48x24xf32, #tpu.memory_space<vmem>>, %arg10: memref<1x48x256xf32, #tpu.memory_space<vmem>>) attributes {dimension_semantics = [#tpu.dimension_semantics<parallel>], iteration_bounds = array<i64: 2>, scalar_prefetch = 0 : i64, scratch_operands = 0 : i64, tpu.core_type = #tpu.core_type<tc>, window_params = [{transform_indices = @transform_0, window_bounds = array<i64: 1, 9, 256>}, {pipeline_mode = #tpu.pipeline_mode<synchronous>, transform_indices = @transform_1, window_bounds = array<i64: 48, 9>}, {pipeline_mode = #tpu.pipeline_mode<synchronous>, transform_indices = @transform_2, window_bounds = array<i64: 48, 1>}, {pipeline_mode = #tpu.pipeline_mode<synchronous>, transform_indices = @transform_3, window_bounds = array<i64: 4, 256>}, {pipeline_mode = #tpu.pipeline_mode<synchronous>, transform_indices = @transform_4, window_bounds = array<i64: 48, 9>}, {pipeline_mode = #tpu.pipeline_mode<synchronous>, transform_indices = @transform_5, window_bounds = array<i64: 48, 9>}, {pipeline_mode = #tpu.pipeline_mode<synchronous>, transform_indices = @transform_6, window_bounds = array<i64: 96, 1>}, {pipeline_mode = #tpu.pipeline_mode<synchronous>, transform_indices = @transform_7, window_bounds = array<i64: 48, 24>}, {pipeline_mode = #tpu.pipeline_mode<synchronous>, transform_indices = @transform_8, window_bounds = array<i64: 48, 24>}, {transform_indices = @transform_9, window_bounds = array<i64: 1, 48, 256>}]} {
    %c0 = arith.constant 0 : index
    %c0_0 = arith.constant 0 : index
    %c0_1 = arith.constant 0 : index
    %0 = vector.load %arg1[%c0, %c0_0, %c0_1] : memref<1x9x256xf32, #tpu.memory_space<vmem>>, vector<1x9x256xf32>
    %1 = vector.shape_cast %0 : vector<1x9x256xf32> to vector<9x256xf32>
    %2 = arith.truncf %1 : vector<9x256xf32> to vector<9x256xbf16>
    %c0_2 = arith.constant 0 : index
    %c0_3 = arith.constant 0 : index
    %3 = vector.load %arg2[%c0_2, %c0_3] : memref<48x9xbf16, #tpu.memory_space<vmem>>, vector<48x9xbf16>
    %cst = arith.constant dense<0.000000e+00> : vector<48x256xf32>
    %4 = tpu.matmul %3, %2, %cst {dimension_numbers = #tpu.dot_dimension_numbers<[1], [0], [0], [1], [0, 0, 1, 1], [], []>} : vector<48x9xbf16>, vector<9x256xbf16>, vector<48x256xf32> -> vector<48x256xf32>
    %c0_4 = arith.constant 0 : index
    %c0_5 = arith.constant 0 : index
    %5 = vector.load %arg3[%c0_4, %c0_5] : memref<48x1xf32, #tpu.memory_space<vmem>>, vector<48x1xf32>
    %6 = vector.broadcast %5 : vector<48x1xf32> to vector<48x256xf32>
    %7 = arith.addf %4, %6 : vector<48x256xf32>
    %c0_6 = arith.constant 0 : index
    %c0_7 = arith.constant 0 : index
    %8 = vector.load %arg4[%c0_6, %c0_7] : memref<4x256xf32, #tpu.memory_space<vmem>>, vector<4x256xf32>
    %9 = vector.extract_strided_slice %8 {offsets = [0, 0], sizes = [1, 256], strides = [1, 1]} : vector<4x256xf32> to vector<1x256xf32>
    %10 = vector.extract_strided_slice %8 {offsets = [1, 0], sizes = [1, 256], strides = [1, 1]} : vector<4x256xf32> to vector<1x256xf32>
    %11 = vector.extract_strided_slice %8 {offsets = [2, 0], sizes = [1, 256], strides = [1, 1]} : vector<4x256xf32> to vector<1x256xf32>
    %12 = vector.extract_strided_slice %8 {offsets = [3, 0], sizes = [1, 256], strides = [1, 1]} : vector<4x256xf32> to vector<1x256xf32>
    %c0_8 = arith.constant 0 : index
    %c0_9 = arith.constant 0 : index
    %13 = vector.load %arg5[%c0_8, %c0_9] : memref<48x9xf32, #tpu.memory_space<vmem>>, vector<48x9xf32>
    %c0_10 = arith.constant 0 : index
    %c0_11 = arith.constant 0 : index
    %14 = vector.load %arg6[%c0_10, %c0_11] : memref<48x9xf32, #tpu.memory_space<vmem>>, vector<48x9xf32>
    %cst_12 = arith.constant 0.000000e+00 : f32
    %15 = vector.broadcast %cst_12 : f32 to vector<48x256xf32>
    %cst_13 = arith.constant 0.000000e+00 : f32
    %16 = vector.broadcast %cst_13 : f32 to vector<48x256xf32>
    %c17_i32 = arith.constant 17 : i32
    %17 = tpu.dynamic_rotate %7 by %c17_i32 dim 1 : vector<48x256xf32>, i32 -> vector<48x256xf32>
    %18 = arith.mulf %9, %11 : vector<1x256xf32>
    %19 = vector.broadcast %18 : vector<1x256xf32> to vector<48x256xf32>
    %20 = arith.mulf %17, %19 : vector<48x256xf32>
    %21 = vector.extract_strided_slice %13 {offsets = [0, 0], sizes = [48, 1], strides = [1, 1]} : vector<48x9xf32> to vector<48x1xf32>
    %22 = vector.broadcast %21 : vector<48x1xf32> to vector<48x256xf32>
    %23 = arith.mulf %22, %20 : vector<48x256xf32>
    %24 = arith.addf %15, %23 : vector<48x256xf32>
    %25 = vector.extract_strided_slice %14 {offsets = [0, 0], sizes = [48, 1], strides = [1, 1]} : vector<48x9xf32> to vector<48x1xf32>
    %26 = vector.broadcast %25 : vector<48x1xf32> to vector<48x256xf32>
    %27 = arith.mulf %26, %20 : vector<48x256xf32>
    %28 = arith.addf %16, %27 : vector<48x256xf32>
    %c16_i32 = arith.constant 16 : i32
    %29 = tpu.dynamic_rotate %7 by %c16_i32 dim 1 : vector<48x256xf32>, i32 -> vector<48x256xf32>
    %30 = vector.broadcast %9 : vector<1x256xf32> to vector<48x256xf32>
    %31 = arith.mulf %29, %30 : vector<48x256xf32>
    %32 = vector.extract_strided_slice %13 {offsets = [0, 1], sizes = [48, 1], strides = [1, 1]} : vector<48x9xf32> to vector<48x1xf32>
    %33 = vector.broadcast %32 : vector<48x1xf32> to vector<48x256xf32>
    %34 = arith.mulf %33, %31 : vector<48x256xf32>
    %35 = arith.addf %24, %34 : vector<48x256xf32>
    %36 = vector.extract_strided_slice %14 {offsets = [0, 1], sizes = [48, 1], strides = [1, 1]} : vector<48x9xf32> to vector<48x1xf32>
    %37 = vector.broadcast %36 : vector<48x1xf32> to vector<48x256xf32>
    %38 = arith.mulf %37, %31 : vector<48x256xf32>
    %39 = arith.addf %28, %38 : vector<48x256xf32>
    %c15_i32 = arith.constant 15 : i32
    %40 = tpu.dynamic_rotate %7 by %c15_i32 dim 1 : vector<48x256xf32>, i32 -> vector<48x256xf32>
    %41 = arith.mulf %9, %12 : vector<1x256xf32>
    %42 = vector.broadcast %41 : vector<1x256xf32> to vector<48x256xf32>
    %43 = arith.mulf %40, %42 : vector<48x256xf32>
    %44 = vector.extract_strided_slice %13 {offsets = [0, 2], sizes = [48, 1], strides = [1, 1]} : vector<48x9xf32> to vector<48x1xf32>
    %45 = vector.broadcast %44 : vector<48x1xf32> to vector<48x256xf32>
    %46 = arith.mulf %45, %43 : vector<48x256xf32>
    %47 = arith.addf %35, %46 : vector<48x256xf32>
    %48 = vector.extract_strided_slice %14 {offsets = [0, 2], sizes = [48, 1], strides = [1, 1]} : vector<48x9xf32> to vector<48x1xf32>
    %49 = vector.broadcast %48 : vector<48x1xf32> to vector<48x256xf32>
    %50 = arith.mulf %49, %43 : vector<48x256xf32>
    %51 = arith.addf %39, %50 : vector<48x256xf32>
    %c1_i32 = arith.constant 1 : i32
    %52 = tpu.dynamic_rotate %7 by %c1_i32 dim 1 : vector<48x256xf32>, i32 -> vector<48x256xf32>
    %53 = vector.broadcast %11 : vector<1x256xf32> to vector<48x256xf32>
    %54 = arith.mulf %52, %53 : vector<48x256xf32>
    %55 = vector.extract_strided_slice %13 {offsets = [0, 3], sizes = [48, 1], strides = [1, 1]} : vector<48x9xf32> to vector<48x1xf32>
    %56 = vector.broadcast %55 : vector<48x1xf32> to vector<48x256xf32>
    %57 = arith.mulf %56, %54 : vector<48x256xf32>
    %58 = arith.addf %47, %57 : vector<48x256xf32>
    %59 = vector.extract_strided_slice %14 {offsets = [0, 3], sizes = [48, 1], strides = [1, 1]} : vector<48x9xf32> to vector<48x1xf32>
    %60 = vector.broadcast %59 : vector<48x1xf32> to vector<48x256xf32>
    %61 = arith.mulf %60, %54 : vector<48x256xf32>
    %62 = arith.addf %51, %61 : vector<48x256xf32>
    %63 = vector.extract_strided_slice %13 {offsets = [0, 4], sizes = [48, 1], strides = [1, 1]} : vector<48x9xf32> to vector<48x1xf32>
    %64 = vector.broadcast %63 : vector<48x1xf32> to vector<48x256xf32>
    %65 = arith.mulf %64, %7 : vector<48x256xf32>
    %66 = arith.addf %58, %65 : vector<48x256xf32>
    %67 = vector.extract_strided_slice %14 {offsets = [0, 4], sizes = [48, 1], strides = [1, 1]} : vector<48x9xf32> to vector<48x1xf32>
    %68 = vector.broadcast %67 : vector<48x1xf32> to vector<48x256xf32>
    %69 = arith.mulf %68, %7 : vector<48x256xf32>
    %70 = arith.addf %62, %69 : vector<48x256xf32>
    %c255_i32 = arith.constant 255 : i32
    %71 = tpu.dynamic_rotate %7 by %c255_i32 dim 1 : vector<48x256xf32>, i32 -> vector<48x256xf32>
    %72 = vector.broadcast %12 : vector<1x256xf32> to vector<48x256xf32>
    %73 = arith.mulf %71, %72 : vector<48x256xf32>
    %74 = vector.extract_strided_slice %13 {offsets = [0, 5], sizes = [48, 1], strides = [1, 1]} : vector<48x9xf32> to vector<48x1xf32>
    %75 = vector.broadcast %74 : vector<48x1xf32> to vector<48x256xf32>
    %76 = arith.mulf %75, %73 : vector<48x256xf32>
    %77 = arith.addf %66, %76 : vector<48x256xf32>
    %78 = vector.extract_strided_slice %14 {offsets = [0, 5], sizes = [48, 1], strides = [1, 1]} : vector<48x9xf32> to vector<48x1xf32>
    %79 = vector.broadcast %78 : vector<48x1xf32> to vector<48x256xf32>
    %80 = arith.mulf %79, %73 : vector<48x256xf32>
    %81 = arith.addf %70, %80 : vector<48x256xf32>
    %c241_i32 = arith.constant 241 : i32
    %82 = tpu.dynamic_rotate %7 by %c241_i32 dim 1 : vector<48x256xf32>, i32 -> vector<48x256xf32>
    %83 = arith.mulf %10, %11 : vector<1x256xf32>
    %84 = vector.broadcast %83 : vector<1x256xf32> to vector<48x256xf32>
    %85 = arith.mulf %82, %84 : vector<48x256xf32>
    %86 = vector.extract_strided_slice %13 {offsets = [0, 6], sizes = [48, 1], strides = [1, 1]} : vector<48x9xf32> to vector<48x1xf32>
    %87 = vector.broadcast %86 : vector<48x1xf32> to vector<48x256xf32>
    %88 = arith.mulf %87, %85 : vector<48x256xf32>
    %89 = arith.addf %77, %88 : vector<48x256xf32>
    %90 = vector.extract_strided_slice %14 {offsets = [0, 6], sizes = [48, 1], strides = [1, 1]} : vector<48x9xf32> to vector<48x1xf32>
    %91 = vector.broadcast %90 : vector<48x1xf32> to vector<48x256xf32>
    %92 = arith.mulf %91, %85 : vector<48x256xf32>
    %93 = arith.addf %81, %92 : vector<48x256xf32>
    %c240_i32 = arith.constant 240 : i32
    %94 = tpu.dynamic_rotate %7 by %c240_i32 dim 1 : vector<48x256xf32>, i32 -> vector<48x256xf32>
    %95 = vector.broadcast %10 : vector<1x256xf32> to vector<48x256xf32>
    %96 = arith.mulf %94, %95 : vector<48x256xf32>
    %97 = vector.extract_strided_slice %13 {offsets = [0, 7], sizes = [48, 1], strides = [1, 1]} : vector<48x9xf32> to vector<48x1xf32>
    %98 = vector.broadcast %97 : vector<48x1xf32> to vector<48x256xf32>
    %99 = arith.mulf %98, %96 : vector<48x256xf32>
    %100 = arith.addf %89, %99 : vector<48x256xf32>
    %101 = vector.extract_strided_slice %14 {offsets = [0, 7], sizes = [48, 1], strides = [1, 1]} : vector<48x9xf32> to vector<48x1xf32>
    %102 = vector.broadcast %101 : vector<48x1xf32> to vector<48x256xf32>
    %103 = arith.mulf %102, %96 : vector<48x256xf32>
    %104 = arith.addf %93, %103 : vector<48x256xf32>
    %c239_i32 = arith.constant 239 : i32
    %105 = tpu.dynamic_rotate %7 by %c239_i32 dim 1 : vector<48x256xf32>, i32 -> vector<48x256xf32>
    %106 = arith.mulf %10, %12 : vector<1x256xf32>
    %107 = vector.broadcast %106 : vector<1x256xf32> to vector<48x256xf32>
    %108 = arith.mulf %105, %107 : vector<48x256xf32>
    %109 = vector.extract_strided_slice %13 {offsets = [0, 8], sizes = [48, 1], strides = [1, 1]} : vector<48x9xf32> to vector<48x1xf32>
    %110 = vector.broadcast %109 : vector<48x1xf32> to vector<48x256xf32>
    %111 = arith.mulf %110, %108 : vector<48x256xf32>
    %112 = arith.addf %100, %111 : vector<48x256xf32>
    %113 = vector.extract_strided_slice %14 {offsets = [0, 8], sizes = [48, 1], strides = [1, 1]} : vector<48x9xf32> to vector<48x1xf32>
    %114 = vector.broadcast %113 : vector<48x1xf32> to vector<48x256xf32>
    %115 = arith.mulf %114, %108 : vector<48x256xf32>
    %116 = arith.addf %104, %115 : vector<48x256xf32>
    %c0_14 = arith.constant 0 : index
    %c0_15 = arith.constant 0 : index
    %117 = vector.load %arg8[%c0_14, %c0_15] : memref<48x24xf32, #tpu.memory_space<vmem>>, vector<48x24xf32>
    %c0_16 = arith.constant 0 : index
    %c0_17 = arith.constant 0 : index
    %118 = vector.load %arg9[%c0_16, %c0_17] : memref<48x24xf32, #tpu.memory_space<vmem>>, vector<48x24xf32>
    %c0_18 = arith.constant 0 : index
    %c0_19 = arith.constant 0 : index
    %119 = vector.load %arg7[%c0_18, %c0_19] : memref<96x1xf32, #tpu.memory_space<vmem>>, vector<96x1xf32>
    %120 = vector.extract_strided_slice %112 {offsets = [0, 0], sizes = [24, 256], strides = [1, 1]} : vector<48x256xf32> to vector<24x256xf32>
    %cst_20 = arith.constant dense<0.000000e+00> : vector<48x256xf32>
    %121 = tpu.matmul %117, %120, %cst_20 {dimension_numbers = #tpu.dot_dimension_numbers<[1], [0], [0], [1], [0, 0, 1, 1], [], []>} : vector<48x24xf32>, vector<24x256xf32>, vector<48x256xf32> -> vector<48x256xf32>
    %122 = vector.extract_strided_slice %116 {offsets = [0, 0], sizes = [24, 256], strides = [1, 1]} : vector<48x256xf32> to vector<24x256xf32>
    %cst_21 = arith.constant dense<0.000000e+00> : vector<48x256xf32>
    %123 = tpu.matmul %118, %122, %cst_21 {dimension_numbers = #tpu.dot_dimension_numbers<[1], [0], [0], [1], [0, 0, 1, 1], [], []>} : vector<48x24xf32>, vector<24x256xf32>, vector<48x256xf32> -> vector<48x256xf32>
    %124 = arith.addf %121, %123 : vector<48x256xf32>
    %125 = vector.extract_strided_slice %119 {offsets = [0, 0], sizes = [48, 1], strides = [1, 1]} : vector<96x1xf32> to vector<48x1xf32>
    %126 = vector.broadcast %125 : vector<48x1xf32> to vector<48x256xf32>
    %127 = arith.addf %124, %126 : vector<48x256xf32>
    %128 = vector.extract_strided_slice %112 {offsets = [24, 0], sizes = [24, 256], strides = [1, 1]} : vector<48x256xf32> to vector<24x256xf32>
    %cst_22 = arith.constant dense<0.000000e+00> : vector<48x256xf32>
    %129 = tpu.matmul %117, %128, %cst_22 {dimension_numbers = #tpu.dot_dimension_numbers<[1], [0], [0], [1], [0, 0, 1, 1], [], []>} : vector<48x24xf32>, vector<24x256xf32>, vector<48x256xf32> -> vector<48x256xf32>
    %130 = vector.extract_strided_slice %116 {offsets = [24, 0], sizes = [24, 256], strides = [1, 1]} : vector<48x256xf32> to vector<24x256xf32>
    %cst_23 = arith.constant dense<0.000000e+00> : vector<48x256xf32>
    %131 = tpu.matmul %118, %130, %cst_23 {dimension_numbers = #tpu.dot_dimension_numbers<[1], [0], [0], [1], [0, 0, 1, 1], [], []>} : vector<48x24xf32>, vector<24x256xf32>, vector<48x256xf32> -> vector<48x256xf32>
    %132 = arith.addf %129, %131 : vector<48x256xf32>
    %133 = vector.extract_strided_slice %119 {offsets = [48, 0], sizes = [48, 1], strides = [1, 1]} : vector<96x1xf32> to vector<48x1xf32>
    %134 = vector.broadcast %133 : vector<48x1xf32> to vector<48x256xf32>
    %135 = arith.addf %132, %134 : vector<48x256xf32>
    %cst_24 = arith.constant dense<0xFF800000> : vector<256xf32>
    %136 = vector.multi_reduction <maximumf>, %127, %cst_24 [0] : vector<48x256xf32> to vector<256xf32>
    %137 = vector.shape_cast %136 : vector<256xf32> to vector<1x256xf32>
    %138 = vector.broadcast %137 : vector<1x256xf32> to vector<48x256xf32>
    %139 = arith.subf %127, %138 : vector<48x256xf32>
    %140 = math.exp %139 : vector<48x256xf32>
    %cst_25 = arith.constant dense<0.000000e+00> : vector<256xf32>
    %141 = vector.multi_reduction <add>, %140, %cst_25 [0] : vector<48x256xf32> to vector<256xf32>
    %142 = vector.shape_cast %141 : vector<256xf32> to vector<1x256xf32>
    %143 = tpu.reciprocal %142 {approx = true} : vector<1x256xf32> -> vector<1x256xf32>
    %144 = vector.broadcast %143 : vector<1x256xf32> to vector<48x256xf32>
    %145 = arith.mulf %140, %144 : vector<48x256xf32>
    %146 = arith.mulf %145, %7 : vector<48x256xf32>
    %147 = arith.addf %146, %135 : vector<48x256xf32>
    %c0_26 = arith.constant 0 : index
    %c0_27 = arith.constant 0 : index
    %c0_28 = arith.constant 0 : index
    %148 = vector.load %arg10[%c0_26, %c0_27, %c0_28] : memref<1x48x256xf32, #tpu.memory_space<vmem>>, vector<1x48x256xf32>
    %149 = vector.shape_cast %148 : vector<1x48x256xf32> to vector<48x256xf32>
    %150 = vector.shape_cast %147 : vector<48x256xf32> to vector<1x48x256xf32>
    tpu.vector_store %arg10[%c0_26, %c0_27, %c0_28], %150 {strides = array<i32>} : memref<1x48x256xf32, #tpu.memory_space<vmem>>, vector<1x48x256xf32>,
    return
  }
  func.func @transform_0(%arg0: i32) -> (i32, i32, i32) {
    %c0_i32 = arith.constant 0 : i32
    %c0_i32_0 = arith.constant 0 : i32
    %c0_i32_1 = arith.constant 0 : i32
    return %arg0, %c0_i32, %c0_i32_0 : i32, i32, i32
  }
  func.func @transform_1(%arg0: i32) -> (i32, i32) {
    %c0_i32 = arith.constant 0 : i32
    %c0_i32_0 = arith.constant 0 : i32
    %c0_i32_1 = arith.constant 0 : i32
    return %c0_i32, %c0_i32_0 : i32, i32
  }
  func.func @transform_2(%arg0: i32) -> (i32, i32) {
    %c0_i32 = arith.constant 0 : i32
    %c0_i32_0 = arith.constant 0 : i32
    %c0_i32_1 = arith.constant 0 : i32
    return %c0_i32, %c0_i32_0 : i32, i32
  }
  func.func @transform_3(%arg0: i32) -> (i32, i32) {
    %c0_i32 = arith.constant 0 : i32
    %c0_i32_0 = arith.constant 0 : i32
    %c0_i32_1 = arith.constant 0 : i32
    return %c0_i32, %c0_i32_0 : i32, i32
  }
  func.func @transform_4(%arg0: i32) -> (i32, i32) {
    %c0_i32 = arith.constant 0 : i32
    %c0_i32_0 = arith.constant 0 : i32
    %c0_i32_1 = arith.constant 0 : i32
    return %c0_i32, %c0_i32_0 : i32, i32
  }
  func.func @transform_5(%arg0: i32) -> (i32, i32) {
    %c0_i32 = arith.constant 0 : i32
    %c0_i32_0 = arith.constant 0 : i32
    %c0_i32_1 = arith.constant 0 : i32
    return %c0_i32, %c0_i32_0 : i32, i32
  }
  func.func @transform_6(%arg0: i32) -> (i32, i32) {
    %c0_i32 = arith.constant 0 : i32
    %c0_i32_0 = arith.constant 0 : i32
    %c0_i32_1 = arith.constant 0 : i32
    return %c0_i32, %c0_i32_0 : i32, i32
  }
  func.func @transform_7(%arg0: i32) -> (i32, i32) {
    %c0_i32 = arith.constant 0 : i32
    %c0_i32_0 = arith.constant 0 : i32
    %c0_i32_1 = arith.constant 0 : i32
    return %c0_i32, %c0_i32_0 : i32, i32
  }
  func.func @transform_8(%arg0: i32) -> (i32, i32) {
    %c0_i32 = arith.constant 0 : i32
    %c0_i32_0 = arith.constant 0 : i32
    %c0_i32_1 = arith.constant 0 : i32
    return %c0_i32, %c0_i32_0 : i32, i32
  }
  func.func @transform_9(%arg0: i32) -> (i32, i32, i32) {
    %c0_i32 = arith.constant 0 : i32
    %c0_i32_0 = arith.constant 0 : i32
    %c0_i32_1 = arith.constant 0 : i32
    return %arg0, %c0_i32, %c0_i32_0 : i32, i32, i32
  }
}

</mosaic_0001>

<llo_original>
// kernel: tpu_custom_call.1
$region0: #{tpu_custom_call.1}
  #allocation0 [shape = 'u32[]', space=smem, size = 0x4, offset = 0x4, fixed_abs, tag = 'smem constant byte address 0x4 - core index']
  #allocation1 [shape = 'u32[144,128]{1,0:T(1,128)}', space=vmem, size = 0x12000, scoped, tag = 'internal scratch']
  %s0 = inlined_call_operand.vmem [shape: f32[2,9,256], index: 0, kind: input, shape index: {}]
  %s1 = inlined_call_operand.vmem [shape: bf16[48,9], index: 1, kind: input, shape index: {}]
  %s2 = inlined_call_operand.vmem [shape: f32[48,1], index: 2, kind: input, shape index: {}]
  %s3 = inlined_call_operand.vmem [shape: f32[4,256], index: 3, kind: input, shape index: {}]
  %s4 = inlined_call_operand.vmem [shape: f32[48,9], index: 4, kind: input, shape index: {}]
  %s5 = inlined_call_operand.vmem [shape: f32[48,9], index: 5, kind: input, shape index: {}]
  %s6 = inlined_call_operand.vmem [shape: f32[96,1], index: 6, kind: input, shape index: {}]
  %s7 = inlined_call_operand.vmem [shape: f32[48,24], index: 7, kind: input, shape index: {}]
  %s8 = inlined_call_operand.vmem [shape: f32[48,24], index: 8, kind: input, shape index: {}]
  %s9 = inlined_call_operand.hbm [shape: f32[2,48,256], index: 9, kind: output, shape index: {}]
  %s10 = sld [smem:[#allocation0]]
  $region69: #{tpu_custom_call.1} parent=0
    _
  %s12 = ssub.s32 1, %s10
  %s13 = scalar_select 0, %s12, %s10
  $region1: #{tpu_custom_call.1} parent=0
    #allocation2 [shape = 'u8[98304]{0}', space=vmem, size = 0x18000, scoped, tag = 'output window, operand 0']
    #allocation3 [shape = 's32[2]{0}', space=sflag, size = 0x8, scoped, tag = 'scoped memory for tpu_custom_call.1']
    %14 = vsyncpa [#allocation3], 0
    %s15 = scalar_lea.sflag [#allocation3], 1
    %16 = vsyncpa %s15, 0
    loop: start=0, step=1, limit=4
    $region2: #{tpu_custom_call.1} parent=1 // loop_pre_header
      _
    $region3: #{tpu_custom_call.1} parent=1 // loop_header
      %s18 = sphi 0, %s22
      %p19 = scmp.ge.s32.totalorder %s18, 4
      %s28 = sphi 0, %s30
      %s31 = sphi 0, %s28
      %s32 = sphi 0, %s31
      %s48 = sphi 0, %s32
      %s52 = sphi 0, %s52
      %s54 = sphi 0, %s52
      %s55 = sphi 0, %s54
      %s69 = sphi 0, %s55
      %s73 = sphi 0, %s73
      %s75 = sphi 0, %s73
      %s76 = sphi 0, %s75
      %s90 = sphi 0, %s76
      %s94 = sphi 0, %s94
      %s96 = sphi 0, %s94
      %s97 = sphi 0, %s96
      %s111 = sphi 0, %s97
      %s115 = sphi 0, %s115
      %s117 = sphi 0, %s115
      %s118 = sphi 0, %s117
      %s132 = sphi 0, %s118
      %s136 = sphi 0, %s136
      %s138 = sphi 0, %s136
      %s139 = sphi 0, %s138
      %s153 = sphi 0, %s139
      %s157 = sphi 0, %s157
      %s159 = sphi 0, %s157
      %s160 = sphi 0, %s159
      %s174 = sphi 0, %s160
      %s178 = sphi 0, %s178
      %s180 = sphi 0, %s178
      %s181 = sphi 0, %s180
      %s195 = sphi 0, %s181
      %s199 = sphi 0, %s199
      %s201 = sphi 0, %s199
      %s202 = sphi 0, %s201
      %s216 = sphi 0, %s202
      %s222 = sphi 0, %s224
      %s225 = sphi 0, %s222
      %s226 = sphi 0, %s225
      %s242 = sphi 0, %s226
    $region4: #{tpu_custom_call.1} parent=1 // loop_header_branch
      %21 = sbr.rel (%p19) target = $region8
    $region5: #{tpu_custom_call.1} parent=1 // loop_body
      %s23 = ssub.s32 %s18, 1
      %s24 = ssub.s32 %s18, 2
      %s25 = sadd.s32 %s18, 1
      %s26 = ssub.s32 %s18, %s25
      %p27 = scmp.eq.s32.totalorder %s26, 0
      %s29 = sadd.s32 %s28, 1
      %s30 = scalar_select %p27, %s28, %s29
      %p33 = pneg %p27
      %p34 = scmp.eq.s32.totalorder %s18, 1
      %p35 = por %p33, %p34
      %p36 = scmp.ne.s32.totalorder %s28, %s31
      %p37 = scmp.eq.s32.totalorder %s18, 0
      %p38 = por %p36, %p37
      %p39 = scmp.ne.s32.totalorder %s28, %s31
      %p40 = scmp.eq.s32.totalorder %s23, 1
      %p41 = por %p39, %p40
      %p42 = scmp.ne.s32.totalorder %s31, %s32
      %p43 = scmp.eq.s32.totalorder %s23, 0
      %p44 = por %p42, %p43
      %p45 = scmp.ne.s32.totalorder %s31, %s32
      %p46 = scmp.eq.s32.totalorder %s24, 1
      %p47 = por %p45, %p46
      %p49 = scmp.ne.s32.totalorder %s32, %s48
      %p50 = scmp.eq.s32.totalorder %s24, 0
      %p51 = por %p49, %p50
      %s53 = sadd.s32 %s52, 1
      %p56 = scmp.eq.s32.totalorder %s18, 1
      %p57 = scmp.ne.s32.totalorder %s52, %s54
      %p58 = scmp.eq.s32.totalorder %s18, 0
      %p59 = por %p57, %p58
      %p60 = scmp.ne.s32.totalorder %s52, %s54
      %p61 = scmp.eq.s32.totalorder %s23, 1
      %p62 = por %p60, %p61
      %p63 = scmp.ne.s32.totalorder %s54, %s55
      %p64 = scmp.eq.s32.totalorder %s23, 0
      %p65 = por %p63, %p64
      %p66 = scmp.ne.s32.totalorder %s54, %s55
      %p67 = scmp.eq.s32.totalorder %s24, 1
      %p68 = por %p66, %p67
      %p70 = scmp.ne.s32.totalorder %s55, %s69
      %p71 = scmp.eq.s32.totalorder %s24, 0
      %p72 = por %p70, %p71
      %s74 = sadd.s32 %s73, 1
      %p77 = scmp.eq.s32.totalorder %s18, 1
      %p78 = scmp.ne.s32.totalorder %s73, %s75
      %p79 = scmp.eq.s32.totalorder %s18, 0
      %p80 = por %p78, %p79
      %p81 = scmp.ne.s32.totalorder %s73, %s75
      %p82 = scmp.eq.s32.totalorder %s23, 1
      %p83 = por %p81, %p82
      %p84 = scmp.ne.s32.totalorder %s75, %s76
      %p85 = scmp.eq.s32.totalorder %s23, 0
      %p86 = por %p84, %p85
      %p87 = scmp.ne.s32.totalorder %s75, %s76
      %p88 = scmp.eq.s32.totalorder %s24, 1
      %p89 = por %p87, %p88
      %p91 = scmp.ne.s32.totalorder %s76, %s90
      %p92 = scmp.eq.s32.totalorder %s24, 0
      %p93 = por %p91, %p92
      %s95 = sadd.s32 %s94, 1
      %p98 = scmp.eq.s32.totalorder %s18, 1
      %p99 = scmp.ne.s32.totalorder %s94, %s96
      %p100 = scmp.eq.s32.totalorder %s18, 0
      %p101 = por %p99, %p100
      %p102 = scmp.ne.s32.totalorder %s94, %s96
      %p103 = scmp.eq.s32.totalorder %s23, 1
      %p104 = por %p102, %p103
      %p105 = scmp.ne.s32.totalorder %s96, %s97
      %p106 = scmp.eq.s32.totalorder %s23, 0
      %p107 = por %p105, %p106
      %p108 = scmp.ne.s32.totalorder %s96, %s97
      %p109 = scmp.eq.s32.totalorder %s24, 1
      %p110 = por %p108, %p109
      %p112 = scmp.ne.s32.totalorder %s97, %s111
      %p113 = scmp.eq.s32.totalorder %s24, 0
      %p114 = por %p112, %p113
      %s116 = sadd.s32 %s115, 1
      %p119 = scmp.eq.s32.totalorder %s18, 1
      %p120 = scmp.ne.s32.totalorder %s115, %s117
      %p121 = scmp.eq.s32.totalorder %s18, 0
      %p122 = por %p120, %p121
      %p123 = scmp.ne.s32.totalorder %s115, %s117
      %p124 = scmp.eq.s32.totalorder %s23, 1
      %p125 = por %p123, %p124
      %p126 = scmp.ne.s32.totalorder %s117, %s118
      %p127 = scmp.eq.s32.totalorder %s23, 0
      %p128 = por %p126, %p127
      %p129 = scmp.ne.s32.totalorder %s117, %s118
      %p130 = scmp.eq.s32.totalorder %s24, 1
      %p131 = por %p129, %p130
      %p133 = scmp.ne.s32.totalorder %s118, %s132
      %p134 = scmp.eq.s32.totalorder %s24, 0
      %p135 = por %p133, %p134
      %s137 = sadd.s32 %s136, 1
      %p140 = scmp.eq.s32.totalorder %s18, 1
      %p141 = scmp.ne.s32.totalorder %s136, %s138
      %p142 = scmp.eq.s32.totalorder %s18, 0
      %p143 = por %p141, %p142
      %p144 = scmp.ne.s32.totalorder %s136, %s138
      %p145 = scmp.eq.s32.totalorder %s23, 1
      %p146 = por %p144, %p145
      %p147 = scmp.ne.s32.totalorder %s138, %s139
      %p148 = scmp.eq.s32.totalorder %s23, 0
      %p149 = por %p147, %p148
      %p150 = scmp.ne.s32.totalorder %s138, %s139
      %p151 = scmp.eq.s32.totalorder %s24, 1
      %p152 = por %p150, %p151
      %p154 = scmp.ne.s32.totalorder %s139, %s153
      %p155 = scmp.eq.s32.totalorder %s24, 0
      %p156 = por %p154, %p155
      %s158 = sadd.s32 %s157, 1
      %p161 = scmp.eq.s32.totalorder %s18, 1
      %p162 = scmp.ne.s32.totalorder %s157, %s159
      %p163 = scmp.eq.s32.totalorder %s18, 0
      %p164 = por %p162, %p163
      %p165 = scmp.ne.s32.totalorder %s157, %s159
      %p166 = scmp.eq.s32.totalorder %s23, 1
      %p167 = por %p165, %p166
      %p168 = scmp.ne.s32.totalorder %s159, %s160
      %p169 = scmp.eq.s32.totalorder %s23, 0
      %p170 = por %p168, %p169
      %p171 = scmp.ne.s32.totalorder %s159, %s160
      %p172 = scmp.eq.s32.totalorder %s24, 1
      %p173 = por %p171, %p172
      %p175 = scmp.ne.s32.totalorder %s160, %s174
      %p176 = scmp.eq.s32.totalorder %s24, 0
      %p177 = por %p175, %p176
      %s179 = sadd.s32 %s178, 1
      %p182 = scmp.eq.s32.totalorder %s18, 1
      %p183 = scmp.ne.s32.totalorder %s178, %s180
      %p184 = scmp.eq.s32.totalorder %s18, 0
      %p185 = por %p183, %p184
      %p186 = scmp.ne.s32.totalorder %s178, %s180
      %p187 = scmp.eq.s32.totalorder %s23, 1
      %p188 = por %p186, %p187
      %p189 = scmp.ne.s32.totalorder %s180, %s181
      %p190 = scmp.eq.s32.totalorder %s23, 0
      %p191 = por %p189, %p190
      %p192 = scmp.ne.s32.totalorder %s180, %s181
      %p193 = scmp.eq.s32.totalorder %s24, 1
      %p194 = por %p192, %p193
      %p196 = scmp.ne.s32.totalorder %s181, %s195
      %p197 = scmp.eq.s32.totalorder %s24, 0
      %p198 = por %p196, %p197
      %s200 = sadd.s32 %s199, 1
      %p203 = scmp.eq.s32.totalorder %s18, 1
      %p204 = scmp.ne.s32.totalorder %s199, %s201
      %p205 = scmp.eq.s32.totalorder %s18, 0
      %p206 = por %p204, %p205
      %p207 = scmp.ne.s32.totalorder %s199, %s201
      %p208 = scmp.eq.s32.totalorder %s23, 1
      %p209 = por %p207, %p208
      %p210 = scmp.ne.s32.totalorder %s201, %s202
      %p211 = scmp.eq.s32.totalorder %s23, 0
      %p212 = por %p210, %p211
      %p213 = scmp.ne.s32.totalorder %s201, %s202
      %p214 = scmp.eq.s32.totalorder %s24, 1
      %p215 = por %p213, %p214
      %p217 = scmp.ne.s32.totalorder %s202, %s216
      %p218 = scmp.eq.s32.totalorder %s24, 0
      %p219 = por %p217, %p218
      %s220 = ssub.s32 %s18, %s25
      %p221 = scmp.eq.s32.totalorder %s220, 0
      %s223 = sadd.s32 %s222, 1
      %s224 = scalar_select %p221, %s222, %s223
      %p227 = pneg %p221
      %p228 = scmp.eq.s32.totalorder %s18, 1
      %p229 = por %p227, %p228
      %p230 = scmp.ne.s32.totalorder %s222, %s225
      %p231 = scmp.eq.s32.totalorder %s18, 0
      %p232 = por %p230, %p231
      %p233 = scmp.ne.s32.totalorder %s222, %s225
      %p234 = scmp.eq.s32.totalorder %s23, 1
      %p235 = por %p233, %p234
      %p236 = scmp.ne.s32.totalorder %s225, %s226
      %p237 = scmp.eq.s32.totalorder %s23, 0
      %p238 = por %p236, %p237
      %p239 = scmp.ne.s32.totalorder %s225, %s226
      %p240 = scmp.eq.s32.totalorder %s24, 1
      %p241 = por %p239, %p240
      %p243 = scmp.ne.s32.totalorder %s226, %s242
      %p244 = scmp.eq.s32.totalorder %s24, 0
      %p245 = por %p243, %p244
      %p246 = scmp.le.s32.totalorder 1, %s18
      %p247 = scmp.lt.s32.totalorder %s18, 3
      %p248 = pnand %p246, %p247
      %p249 = pneg %p248
      // Predicated region
      $region9: #{tpu_custom_call.1} parent=5 // pred_check
        _
      $region10: #{tpu_custom_call.1} parent=5 // pred_check_branch
        %251 = sbr.rel (%p248) target = $region12
      $region11: #{tpu_custom_call.1} parent=5 // pred_region
        %s252 = ssub.s32 %s18, 1
        // Predicated region
        $region13: #{tpu_custom_call.1} parent=11 // pred_check
          %p253 = pneg %p65
        $region14: #{tpu_custom_call.1} parent=11 // pred_check_branch
          %255 = sbr.rel (%p253) target = $region16
        $region15: #{tpu_custom_call.1} parent=11 // pred_region
          _
        $region16: #{tpu_custom_call.1} parent=11 // pred_fallthru
          _
        // Predicated region
        $region17: #{tpu_custom_call.1} parent=11 // pred_check
          %p256 = pneg %p86
        $region18: #{tpu_custom_call.1} parent=11 // pred_check_branch
          %258 = sbr.rel (%p256) target = $region20
        $region19: #{tpu_custom_call.1} parent=11 // pred_region
          _
        $region20: #{tpu_custom_call.1} parent=11 // pred_fallthru
          _
        // Predicated region
        $region21: #{tpu_custom_call.1} parent=11 // pred_check
          %p259 = pneg %p107
        $region22: #{tpu_custom_call.1} parent=11 // pred_check_branch
          %261 = sbr.rel (%p259) target = $region24
        $region23: #{tpu_custom_call.1} parent=11 // pred_region
          _
        $region24: #{tpu_custom_call.1} parent=11 // pred_fallthru
          _
        // Predicated region
        $region25: #{tpu_custom_call.1} parent=11 // pred_check
          %p262 = pneg %p128
        $region26: #{tpu_custom_call.1} parent=11 // pred_check_branch
          %264 = sbr.rel (%p262) target = $region28
        $region27: #{tpu_custom_call.1} parent=11 // pred_region
          _
        $region28: #{tpu_custom_call.1} parent=11 // pred_fallthru
          _
        // Predicated region
        $region29: #{tpu_custom_call.1} parent=11 // pred_check
          %p265 = pneg %p149
        $region30: #{tpu_custom_call.1} parent=11 // pred_check_branch
          %267 = sbr.rel (%p265) target = $region32
        $region31: #{tpu_custom_call.1} parent=11 // pred_region
          _
        $region32: #{tpu_custom_call.1} parent=11 // pred_fallthru
          _
        // Predicated region
        $region33: #{tpu_custom_call.1} parent=11 // pred_check
          %p268 = pneg %p170
        $region34: #{tpu_custom_call.1} parent=11 // pred_check_branch
          %270 = sbr.rel (%p268) target = $region36
        $region35: #{tpu_custom_call.1} parent=11 // pred_region
          _
        $region36: #{tpu_custom_call.1} parent=11 // pred_fallthru
          _
        // Predicated region
        $region37: #{tpu_custom_call.1} parent=11 // pred_check
          %p271 = pneg %p191
        $region38: #{tpu_custom_call.1} parent=11 // pred_check_branch
          %273 = sbr.rel (%p271) target = $region40
        $region39: #{tpu_custom_call.1} parent=11 // pred_region
          _
        $region40: #{tpu_custom_call.1} parent=11 // pred_fallthru
          _
        // Predicated region
        $region41: #{tpu_custom_call.1} parent=11 // pred_check
          %p274 = pneg %p212
        $region42: #{tpu_custom_call.1} parent=11 // pred_check_branch
          %276 = sbr.rel (%p274) target = $region44
        $region43: #{tpu_custom_call.1} parent=11 // pred_region
          _
        $region44: #{tpu_custom_call.1} parent=11 // pred_fallthru
          _
      $region12: #{tpu_custom_call.1} parent=5 // pred_fallthru
        _
      %p277 = scmp.lt.s32.totalorder %s18, 2
      // Predicated region
      $region45: #{tpu_custom_call.1} parent=5 // pred_check
        %p278 = pneg %p277
      $region46: #{tpu_custom_call.1} parent=5 // pred_check_branch
        %280 = sbr.rel (%p278) target = $region48
      $region47: #{tpu_custom_call.1} parent=5 // pred_region
        // Predicated region
        $region49: #{tpu_custom_call.1} parent=47 // pred_check
          %p281 = pneg %p38
        $region50: #{tpu_custom_call.1} parent=47 // pred_check_branch
          %283 = sbr.rel (%p281) target = $region52
        $region51: #{tpu_custom_call.1} parent=47 // pred_region
          %p284 = scmp.lt.s32.totalorder %s18, 1
          %s285 = scalar_select %p284, %s18, 1
          %s286 = smul.addr %s285, 4
          %s287 = smul.addr %s286, 8
          %s288 = scalar_lea.vmem %s0, %s287
        $region52: #{tpu_custom_call.1} parent=47 // pred_fallthru
          _
      $region48: #{tpu_custom_call.1} parent=5 // pred_fallthru
        _
      %p289 = scmp.le.s32.totalorder 1, %s18
      %p290 = scmp.lt.s32.totalorder %s18, 3
      %p291 = pnand %p289, %p290
      %p292 = pneg %p291
      // Predicated region
      $region53: #{tpu_custom_call.1} parent=5 // pred_check
        _
      $region54: #{tpu_custom_call.1} parent=5 // pred_check_branch
        %294 = sbr.rel (%p291) target = $region56
      $region55: #{tpu_custom_call.1} parent=5 // pred_region
        %s295 = ssub.s32 %s18, 1
        %p296 = scmp.lt.s32.totalorder %s23, 1
        %s297 = scalar_select %p296, %s23, 1
        %s298 = smul.addr %s297, 4
        %s299 = smul.addr %s298, 8
        %s300 = scalar_lea.vmem %s0, %s299
        %p301 = pneg %p44
        %p302 = pneg %p41
        %p303 = pneg %p65
        %p304 = pneg %p62
        %p305 = pneg %p86
        %p306 = pneg %p83
        %p307 = pneg %p107
        %p308 = pneg %p104
        %p309 = pneg %p128
        %p310 = pneg %p125
        %p311 = pneg %p149
        %p312 = pneg %p146
        %p313 = pneg %p170
        %p314 = pneg %p167
        %p315 = pneg %p191
        %p316 = pneg %p188
        %p317 = pneg %p212
        %p318 = pneg %p209
        %p319 = pneg %p238
        %p320 = pneg %p235
        %s321 = sand.u32 %s225, 1
        %s322 = scalar_lea.sflag [#allocation3], %s321
        %s323 = sand.u32 %s225, 1
        %s324 = smul.addr %s323, 96
        %s325 = scalar_lea.vmem [#allocation2], %s324
        %p326 = scmp.lt.s32.totalorder %s23, 1
        %s327 = scalar_select %p326, %s23, 1
        %s328 = smul.addr %s327, 4
        %s329 = smul.addr %s328, 8
        %s330 = scalar_lea.vmem %s0, %s329
        %v332 = vld [vmem:[%s330] sm:$0xff]
        %v333 = vld [vmem:[%s330 + $0x8] sm:$0xff]
        %v334 = vld [vmem:[%s330 + $0x10] sm:$0x1]
        %v335 = vld [vmem:[%s330 + $0x18] sm:$0x1]
        %v336 = vpack.c.bf16 %v334, %v332
        %v337 = vpack.c.bf16 %v335, %v333
        %v338 = vld [vmem:[%s1] sm:$0xf]
        %v339 = vld [vmem:[%s1 + $0x4] sm:$0xf]
        %v340 = vld [vmem:[%s1 + $0x8] sm:$0xf]
        %v341 = vld [vmem:[%s1 + $0xc] sm:$0xf]
        %v342 = vld [vmem:[%s1 + $0x10] sm:$0xf]
        %v343 = vld [vmem:[%s1 + $0x14] sm:$0xf]
        %v344 = vld [vmem:[%s2] sm:$0xff]
        %v345 = vld [vmem:[%s2 + $0x8] sm:$0xff]
        %v346 = vld [vmem:[%s2 + $0x10] sm:$0xff]
        %v347 = vld [vmem:[%s2 + $0x18] sm:$0xff]
        %v348 = vld [vmem:[%s2 + $0x20] sm:$0xff]
        %v349 = vld [vmem:[%s2 + $0x28] sm:$0xff]
        %351 = vset.pattern.permute.xlu0 0
        %352 = vperm.xlu0 %351, %v344
        %v353 = vpop.permute.xlu0 %352
        %356 = vset.pattern.permute.xlu0 0
        %357 = vperm.xlu0 %356, %v345
        %v358 = vpop.permute.xlu0 %357
        %361 = vset.pattern.permute.xlu0 0
        %362 = vperm.xlu0 %361, %v346
        %v363 = vpop.permute.xlu0 %362
        %366 = vset.pattern.permute.xlu0 0
        %367 = vperm.xlu0 %366, %v347
        %v368 = vpop.permute.xlu0 %367
        %371 = vset.pattern.permute.xlu0 0
        %372 = vperm.xlu0 %371, %v348
        %v373 = vpop.permute.xlu0 %372
        %376 = vset.pattern.permute.xlu0 0
        %377 = vperm.xlu0 %376, %v349
        %v378 = vpop.permute.xlu0 %377
        %v386 = vunpack.c.l.b16 %v338
        %v387 = vunpack.c.l.b16 %v339
        %v388 = vunpack.c.l.b16 %v340
        %v389 = vunpack.c.l.b16 %v341
        %v390 = vunpack.c.l.b16 %v342
        %v391 = vunpack.c.l.b16 %v343
        %v392 = vpack.c.b16 %v387, %v386
        %v393 = vpack.c.b16 %v389, %v388
        %v394 = vpack.c.b16 %v391, %v390
        %vm395 = vcmask 72704
        %v397 = vsel %vm395, %v392, 0
        %v400 = vsel %vm395, %v393, 0
        %v403 = vsel %vm395, %v394, 0
        %vm405 = vcmask 1043456
        %vm406 = vcmask 1044480
        %v407 = vsel %vm405, 4294967295, 65535
        %v408 = vsel %vm406, %v407, 0
        %v410 = vand.u32 %v336, %v408
        %v413 = vand.u32 %v337, %v408
        %415 = vmatprep.subr.bf16.mxu0 %v413
        %416 = vmatpush1.bf16.msra.mxu0 %v410
        %417 = vmatprep.subr.bf16.mxu0 0
        %418 = vmatpush1.bf16.msra.mxu0 0
        %419 = vmatprep.subr.bf16.mxu0 0
        %420 = vmatpush1.bf16.msra.mxu0 0
        %421 = vmatprep.subr.bf16.mxu0 0
        %422 = vmatpush1.bf16.msra.mxu0 0
        %423 = vmatprep.subr.bf16.mxu0 0
        %424 = vmatpush1.bf16.msra.mxu0 0
        %425 = vmatprep.subr.bf16.mxu0 0
        %426 = vmatpush1.bf16.msra.mxu0 0
        %427 = vmatprep.subr.bf16.mxu0 0
        %428 = vmatpush1.bf16.msra.mxu0 0
        %429 = vmatprep.subr.bf16.mxu0 0
        %430 = vmatpush1.bf16.msra.mxu0 0
        %431 = vmatprep.subr.bf16.mxu0 0
        %432 = vmatpush1.bf16.msra.mxu0 0
        %433 = vmatprep.subr.bf16.mxu0 0
        %434 = vmatpush1.bf16.msra.mxu0 0
        %435 = vmatprep.subr.bf16.mxu0 0
        %436 = vmatpush1.bf16.msra.mxu0 0
        %437 = vmatprep.subr.bf16.mxu0 0
        %438 = vmatpush1.bf16.msra.mxu0 0
        %439 = vmatprep.subr.bf16.mxu0 0
        %440 = vmatpush1.bf16.msra.mxu0 0
        %441 = vmatprep.subr.bf16.mxu0 0
        %442 = vmatpush1.bf16.msra.mxu0 0
        %443 = vmatprep.subr.bf16.mxu0 0
        %444 = vmatpush1.bf16.msra.mxu0 0
        %445 = vmatprep.subr.bf16.mxu0 0
        %446 = vmatpush1.bf16.msra.mxu0 0
        %447 = vmatprep.mubr.bf16.mxu0 0
        %448 = vmatmul.mubr.bf16.gmra.mrb[0].mxu0 %v397
        %v449 = vpop.f32.mrb[0].mxu0
        %v450 = vadd.f32 %v353, %v449
        %v451 = vpop.f32.mrb[0].mxu0
        %v452 = vadd.f32 %v353, %v451
        %v453 = vpop.f32.mrb[0].mxu0
        %v454 = vadd.f32 %v358, %v453
        %v455 = vpop.f32.mrb[0].mxu0
        %v456 = vadd.f32 %v358, %v455
        %457 = vmatprep.mubr.bf16.mxu0 0
        %458 = vmatmul.mubr.bf16.gmra.mrb[0].mxu0 %v400
        %v459 = vpop.f32.mrb[0].mxu0
        %v460 = vadd.f32 %v363, %v459
        %v461 = vpop.f32.mrb[0].mxu0
        %v462 = vadd.f32 %v363, %v461
        %v463 = vpop.f32.mrb[0].mxu0
        %v464 = vadd.f32 %v368, %v463
        %v465 = vpop.f32.mrb[0].mxu0
        %v466 = vadd.f32 %v368, %v465
        %467 = vmatprep.mubr.bf16.mxu0 0
        %468 = vmatmul.mubr.bf16.gmra.mrb[0].mxu0 %v403
        %v469 = vpop.f32.mrb[0].mxu0
        %v470 = vadd.f32 %v373, %v469
        %v471 = vpop.f32.mrb[0].mxu0
        %v472 = vadd.f32 %v373, %v471
        %v473 = vpop.f32.mrb[0].mxu0
        %v474 = vadd.f32 %v378, %v473
        %v475 = vpop.f32.mrb[0].mxu0
        %v476 = vadd.f32 %v378, %v475
        %477 = vdwg.mxu0
        %v478 = vld [vmem:[%s3] sm:$0xff]
        %v479 = vld [vmem:[%s4] sm:$0xff]
        %v480 = vld [vmem:[%s4 + $0x8] sm:$0xff]
        %v481 = vld [vmem:[%s4 + $0x10] sm:$0xff]
        %v482 = vld [vmem:[%s4 + $0x18] sm:$0xff]
        %v483 = vld [vmem:[%s4 + $0x20] sm:$0xff]
        %v484 = vld [vmem:[%s4 + $0x28] sm:$0xff]
        %v485 = vld [vmem:[%s5] sm:$0xff]
        %v486 = vld [vmem:[%s5 + $0x8] sm:$0xff]
        %v487 = vld [vmem:[%s5 + $0x10] sm:$0xff]
        %v488 = vld [vmem:[%s5 + $0x18] sm:$0xff]
        %v489 = vld [vmem:[%s5 + $0x20] sm:$0xff]
        %v490 = vld [vmem:[%s5 + $0x28] sm:$0xff]
        %491 = vrot.lane.b32.xlu0 %v450, 17
        %v492 = vpop.permute.xlu0 %491
        %493 = vrot.lane.b32.xlu0 %v454, 17
        %v494 = vpop.permute.xlu0 %493
        %495 = vrot.lane.b32.xlu0 %v460, 17
        %v496 = vpop.permute.xlu0 %495
        %497 = vrot.lane.b32.xlu0 %v464, 17
        %v498 = vpop.permute.xlu0 %497
        %499 = vrot.lane.b32.xlu0 %v470, 17
        %v500 = vpop.permute.xlu0 %499
        %501 = vrot.lane.b32.xlu0 %v474, 17
        %v502 = vpop.permute.xlu0 %501
        %503 = vrot.lane.b32.xlu0 %v452, 17
        %v504 = vpop.permute.xlu0 %503
        %505 = vrot.lane.b32.xlu0 %v456, 17
        %v506 = vpop.permute.xlu0 %505
        %507 = vrot.lane.b32.xlu0 %v462, 17
        %v508 = vpop.permute.xlu0 %507
        %509 = vrot.lane.b32.xlu0 %v466, 17
        %v510 = vpop.permute.xlu0 %509
        %511 = vrot.lane.b32.xlu0 %v472, 17
        %v512 = vpop.permute.xlu0 %511
        %513 = vrot.lane.b32.xlu0 %v476, 17
        %v514 = vpop.permute.xlu0 %513
        %v515 = vlaneseq
        %v516 = vand.u32 %v515, 127
        %vm517 = vcmp.lt.s32.totalorder %v516, 17
        %v518 = vsel %vm517, %v492, %v504
        %v519 = vsel %vm517, %v494, %v506
        %v520 = vsel %vm517, %v496, %v508
        %v521 = vsel %vm517, %v498, %v510
        %v522 = vsel %vm517, %v500, %v512
        %v523 = vsel %vm517, %v502, %v514
        %v524 = vsel %vm517, %v504, %v492
        %v525 = vsel %vm517, %v506, %v494
        %v526 = vsel %vm517, %v508, %v496
        %v527 = vsel %vm517, %v510, %v498
        %v528 = vsel %vm517, %v512, %v500
        %v529 = vsel %vm517, %v514, %v502
        %v531 = vrot.slane %v478, 6
        %v532 = vrot.slane %v531, 4
        %v534 = vmul.f32 %v478, %v532
        %v536 = vlaneseq
        %v537 = vshrl.u32 %v536, 7
        %v538 = vsub.s32 0, %v537
        %v539 = vrot.slane %v534, %v538
        %v540 = vlaneseq
        %v541 = vshrl.u32 %v540, 7
        %v542 = vsub.s32 4, %v541
        %v543 = vrot.slane %v534, %v542
        %v546 = vlaneseq
        %v547 = vshrl.u32 %v546, 7
        %v548 = vsub.s32 0, %v547
        %v549 = vrot.slane %v539, %v548
        %v550 = vlaneseq
        %v551 = vshrl.u32 %v550, 7
        %v552 = vsub.s32 0, %v551
        %v553 = vrot.slane %v543, %v552
        %v554 = vmul.f32 %v524, %v549
        %v555 = vmul.f32 %v518, %v553
        %v556 = vmul.f32 %v525, %v549
        %v557 = vmul.f32 %v519, %v553
        %v558 = vmul.f32 %v526, %v549
        %v559 = vmul.f32 %v520, %v553
        %v560 = vmul.f32 %v527, %v549
        %v561 = vmul.f32 %v521, %v553
        %v562 = vmul.f32 %v528, %v549
        %v563 = vmul.f32 %v522, %v553
        %v564 = vmul.f32 %v529, %v549
        %v565 = vmul.f32 %v523, %v553
        %567 = vset.pattern.permute.xlu0 0
        %568 = vperm.xlu0 %567, %v479
        %v569 = vpop.permute.xlu0 %568
        %572 = vset.pattern.permute.xlu0 0
        %573 = vperm.xlu0 %572, %v480
        %v574 = vpop.permute.xlu0 %573
        %577 = vset.pattern.permute.xlu0 0
        %578 = vperm.xlu0 %577, %v481
        %v579 = vpop.permute.xlu0 %578
        %582 = vset.pattern.permute.xlu0 0
        %583 = vperm.xlu0 %582, %v482
        %v584 = vpop.permute.xlu0 %583
        %587 = vset.pattern.permute.xlu0 0
        %588 = vperm.xlu0 %587, %v483
        %v589 = vpop.permute.xlu0 %588
        %592 = vset.pattern.permute.xlu0 0
        %593 = vperm.xlu0 %592, %v484
        %v594 = vpop.permute.xlu0 %593
        %v596 = vmul.f32 %v569, %v554
        %v597 = vmul.f32 %v569, %v555
        %v598 = vmul.f32 %v574, %v556
        %v599 = vmul.f32 %v574, %v557
        %v600 = vmul.f32 %v579, %v558
        %v601 = vmul.f32 %v579, %v559
        %v602 = vmul.f32 %v584, %v560
        %v603 = vmul.f32 %v584, %v561
        %v604 = vmul.f32 %v589, %v562
        %v605 = vmul.f32 %v589, %v563
        %v606 = vmul.f32 %v594, %v564
        %v607 = vmul.f32 %v594, %v565
        %v608 = vadd.f32 %v596, 0.0
        %v609 = vadd.f32 %v597, 0.0
        %v610 = vadd.f32 %v598, 0.0
        %v611 = vadd.f32 %v599, 0.0
        %v612 = vadd.f32 %v600, 0.0
        %v613 = vadd.f32 %v601, 0.0
        %v614 = vadd.f32 %v602, 0.0
        %v615 = vadd.f32 %v603, 0.0
        %v616 = vadd.f32 %v604, 0.0
        %v617 = vadd.f32 %v605, 0.0
        %v618 = vadd.f32 %v606, 0.0
        %v619 = vadd.f32 %v607, 0.0
        %621 = vset.pattern.permute.xlu0 0
        %622 = vperm.xlu0 %621, %v485
        %v623 = vpop.permute.xlu0 %622
        %626 = vset.pattern.permute.xlu0 0
        %627 = vperm.xlu0 %626, %v486
        %v628 = vpop.permute.xlu0 %627
        %631 = vset.pattern.permute.xlu0 0
        %632 = vperm.xlu0 %631, %v487
        %v633 = vpop.permute.xlu0 %632
        %636 = vset.pattern.permute.xlu0 0
        %637 = vperm.xlu0 %636, %v488
        %v638 = vpop.permute.xlu0 %637
        %641 = vset.pattern.permute.xlu0 0
        %642 = vperm.xlu0 %641, %v489
        %v643 = vpop.permute.xlu0 %642
        %646 = vset.pattern.permute.xlu0 0
        %647 = vperm.xlu0 %646, %v490
        %v648 = vpop.permute.xlu0 %647
        %v650 = vmul.f32 %v623, %v554
        %v651 = vmul.f32 %v623, %v555
        %v652 = vmul.f32 %v628, %v556
        %v653 = vmul.f32 %v628, %v557
        %v654 = vmul.f32 %v633, %v558
        %v655 = vmul.f32 %v633, %v559
        %v656 = vmul.f32 %v638, %v560
        %v657 = vmul.f32 %v638, %v561
        %v658 = vmul.f32 %v643, %v562
        %v659 = vmul.f32 %v643, %v563
        %v660 = vmul.f32 %v648, %v564
        %v661 = vmul.f32 %v648, %v565
        %v662 = vadd.f32 %v650, 0.0
        %v663 = vadd.f32 %v651, 0.0
        %v664 = vadd.f32 %v652, 0.0
        %v665 = vadd.f32 %v653, 0.0
        %v666 = vadd.f32 %v654, 0.0
        %v667 = vadd.f32 %v655, 0.0
        %v668 = vadd.f32 %v656, 0.0
        %v669 = vadd.f32 %v657, 0.0
        %v670 = vadd.f32 %v658, 0.0
        %v671 = vadd.f32 %v659, 0.0
        %v672 = vadd.f32 %v660, 0.0
        %v673 = vadd.f32 %v661, 0.0
        %674 = vrot.lane.b32.xlu0 %v450, 16
        %v675 = vpop.permute.xlu0 %674
        %676 = vrot.lane.b32.xlu0 %v454, 16
        %v677 = vpop.permute.xlu0 %676
        %678 = vrot.lane.b32.xlu0 %v460, 16
        %v679 = vpop.permute.xlu0 %678
        %680 = vrot.lane.b32.xlu0 %v464, 16
        %v681 = vpop.permute.xlu0 %680
        %682 = vrot.lane.b32.xlu0 %v470, 16
        %v683 = vpop.permute.xlu0 %682
        %684 = vrot.lane.b32.xlu0 %v474, 16
        %v685 = vpop.permute.xlu0 %684
        %686 = vrot.lane.b32.xlu0 %v452, 16
        %v687 = vpop.permute.xlu0 %686
        %688 = vrot.lane.b32.xlu0 %v456, 16
        %v689 = vpop.permute.xlu0 %688
        %690 = vrot.lane.b32.xlu0 %v462, 16
        %v691 = vpop.permute.xlu0 %690
        %692 = vrot.lane.b32.xlu0 %v466, 16
        %v693 = vpop.permute.xlu0 %692
        %694 = vrot.lane.b32.xlu0 %v472, 16
        %v695 = vpop.permute.xlu0 %694
        %696 = vrot.lane.b32.xlu0 %v476, 16
        %v697 = vpop.permute.xlu0 %696
        %vm698 = vcmp.lt.s32.totalorder %v516, 16
        %v699 = vsel %vm698, %v675, %v687
        %v700 = vsel %vm698, %v677, %v689
        %v701 = vsel %vm698, %v679, %v691
        %v702 = vsel %vm698, %v681, %v693
        %v703 = vsel %vm698, %v683, %v695
        %v704 = vsel %vm698, %v685, %v697
        %v705 = vsel %vm698, %v687, %v675
        %v706 = vsel %vm698, %v689, %v677
        %v707 = vsel %vm698, %v691, %v679
        %v708 = vsel %vm698, %v693, %v681
        %v709 = vsel %vm698, %v695, %v683
        %v710 = vsel %vm698, %v697, %v685
        %v711 = vlaneseq
        %v712 = vshrl.u32 %v711, 7
        %v713 = vsub.s32 0, %v712
        %v714 = vrot.slane %v478, %v713
        %v715 = vlaneseq
        %v716 = vshrl.u32 %v715, 7
        %v717 = vsub.s32 4, %v716
        %v718 = vrot.slane %v478, %v717
        %v721 = vlaneseq
        %v722 = vshrl.u32 %v721, 7
        %v723 = vsub.s32 0, %v722
        %v724 = vrot.slane %v714, %v723
        %v725 = vlaneseq
        %v726 = vshrl.u32 %v725, 7
        %v727 = vsub.s32 0, %v726
        %v728 = vrot.slane %v718, %v727
        %v729 = vmul.f32 %v705, %v724
        %v730 = vmul.f32 %v699, %v728
        %v731 = vmul.f32 %v706, %v724
        %v732 = vmul.f32 %v700, %v728
        %v733 = vmul.f32 %v707, %v724
        %v734 = vmul.f32 %v701, %v728
        %v735 = vmul.f32 %v708, %v724
        %v736 = vmul.f32 %v702, %v728
        %v737 = vmul.f32 %v709, %v724
        %v738 = vmul.f32 %v703, %v728
        %v739 = vmul.f32 %v710, %v724
        %v740 = vmul.f32 %v704, %v728
        %741 = vset.pattern.permute.xlu0 1
        %742 = vperm.xlu0 %741, %v479
        %v743 = vpop.permute.xlu0 %742
        %745 = vset.pattern.permute.xlu0 1
        %746 = vperm.xlu0 %745, %v480
        %v747 = vpop.permute.xlu0 %746
        %749 = vset.pattern.permute.xlu0 1
        %750 = vperm.xlu0 %749, %v481
        %v751 = vpop.permute.xlu0 %750
        %753 = vset.pattern.permute.xlu0 1
        %754 = vperm.xlu0 %753, %v482
        %v755 = vpop.permute.xlu0 %754
        %757 = vset.pattern.permute.xlu0 1
        %758 = vperm.xlu0 %757, %v483
        %v759 = vpop.permute.xlu0 %758
        %761 = vset.pattern.permute.xlu0 1
        %762 = vperm.xlu0 %761, %v484
        %v763 = vpop.permute.xlu0 %762
        %v765 = vmul.f32 %v743, %v729
        %v766 = vmul.f32 %v743, %v730
        %v767 = vmul.f32 %v747, %v731
        %v768 = vmul.f32 %v747, %v732
        %v769 = vmul.f32 %v751, %v733
        %v770 = vmul.f32 %v751, %v734
        %v771 = vmul.f32 %v755, %v735
        %v772 = vmul.f32 %v755, %v736
        %v773 = vmul.f32 %v759, %v737
        %v774 = vmul.f32 %v759, %v738
        %v775 = vmul.f32 %v763, %v739
        %v776 = vmul.f32 %v763, %v740
        %v777 = vadd.f32 %v608, %v765
        %v778 = vadd.f32 %v609, %v766
        %v779 = vadd.f32 %v610, %v767
        %v780 = vadd.f32 %v611, %v768
        %v781 = vadd.f32 %v612, %v769
        %v782 = vadd.f32 %v613, %v770
        %v783 = vadd.f32 %v614, %v771
        %v784 = vadd.f32 %v615, %v772
        %v785 = vadd.f32 %v616, %v773
        %v786 = vadd.f32 %v617, %v774
        %v787 = vadd.f32 %v618, %v775
        %v788 = vadd.f32 %v619, %v776
        %789 = vset.pattern.permute.xlu0 1
        %790 = vperm.xlu0 %789, %v485
        %v791 = vpop.permute.xlu0 %790
        %793 = vset.pattern.permute.xlu0 1
        %794 = vperm.xlu0 %793, %v486
        %v795 = vpop.permute.xlu0 %794
        %797 = vset.pattern.permute.xlu0 1
        %798 = vperm.xlu0 %797, %v487
        %v799 = vpop.permute.xlu0 %798
        %801 = vset.pattern.permute.xlu0 1
        %802 = vperm.xlu0 %801, %v488
        %v803 = vpop.permute.xlu0 %802
        %805 = vset.pattern.permute.xlu0 1
        %806 = vperm.xlu0 %805, %v489
        %v807 = vpop.permute.xlu0 %806
        %809 = vset.pattern.permute.xlu0 1
        %810 = vperm.xlu0 %809, %v490
        %v811 = vpop.permute.xlu0 %810
        %v813 = vmul.f32 %v791, %v729
        %v814 = vmul.f32 %v791, %v730
        %v815 = vmul.f32 %v795, %v731
        %v816 = vmul.f32 %v795, %v732
        %v817 = vmul.f32 %v799, %v733
        %v818 = vmul.f32 %v799, %v734
        %v819 = vmul.f32 %v803, %v735
        %v820 = vmul.f32 %v803, %v736
        %v821 = vmul.f32 %v807, %v737
        %v822 = vmul.f32 %v807, %v738
        %v823 = vmul.f32 %v811, %v739
        %v824 = vmul.f32 %v811, %v740
        %v825 = vadd.f32 %v662, %v813
        %v826 = vadd.f32 %v663, %v814
        %v827 = vadd.f32 %v664, %v815
        %v828 = vadd.f32 %v665, %v816
        %v829 = vadd.f32 %v666, %v817
        %v830 = vadd.f32 %v667, %v818
        %v831 = vadd.f32 %v668, %v819
        %v832 = vadd.f32 %v669, %v820
        %v833 = vadd.f32 %v670, %v821
        %v834 = vadd.f32 %v671, %v822
        %v835 = vadd.f32 %v672, %v823
        %v836 = vadd.f32 %v673, %v824
        %837 = vrot.lane.b32.xlu0 %v450, 15
        %v838 = vpop.permute.xlu0 %837
        %839 = vrot.lane.b32.xlu0 %v454, 15
        %v840 = vpop.permute.xlu0 %839
        %841 = vrot.lane.b32.xlu0 %v460, 15
        %v842 = vpop.permute.xlu0 %841
        %843 = vrot.lane.b32.xlu0 %v464, 15
        %v844 = vpop.permute.xlu0 %843
        %845 = vrot.lane.b32.xlu0 %v470, 15
        %v846 = vpop.permute.xlu0 %845
        %847 = vrot.lane.b32.xlu0 %v474, 15
        %v848 = vpop.permute.xlu0 %847
        %849 = vrot.lane.b32.xlu0 %v452, 15
        %v850 = vpop.permute.xlu0 %849
        %851 = vrot.lane.b32.xlu0 %v456, 15
        %v852 = vpop.permute.xlu0 %851
        %853 = vrot.lane.b32.xlu0 %v462, 15
        %v854 = vpop.permute.xlu0 %853
        %855 = vrot.lane.b32.xlu0 %v466, 15
        %v856 = vpop.permute.xlu0 %855
        %857 = vrot.lane.b32.xlu0 %v472, 15
        %v858 = vpop.permute.xlu0 %857
        %859 = vrot.lane.b32.xlu0 %v476, 15
        %v860 = vpop.permute.xlu0 %859
        %vm861 = vcmp.lt.s32.totalorder %v516, 15
        %v862 = vsel %vm861, %v838, %v850
        %v863 = vsel %vm861, %v840, %v852
        %v864 = vsel %vm861, %v842, %v854
        %v865 = vsel %vm861, %v844, %v856
        %v866 = vsel %vm861, %v846, %v858
        %v867 = vsel %vm861, %v848, %v860
        %v868 = vsel %vm861, %v850, %v838
        %v869 = vsel %vm861, %v852, %v840
        %v870 = vsel %vm861, %v854, %v842
        %v871 = vsel %vm861, %v856, %v844
        %v872 = vsel %vm861, %v858, %v846
        %v873 = vsel %vm861, %v860, %v848
        %v874 = vrot.slane %v478, 7
        %v875 = vrot.slane %v874, 4
        %v877 = vmul.f32 %v478, %v875
        %v879 = vlaneseq
        %v880 = vshrl.u32 %v879, 7
        %v881 = vsub.s32 0, %v880
        %v882 = vrot.slane %v877, %v881
        %v883 = vlaneseq
        %v884 = vshrl.u32 %v883, 7
        %v885 = vsub.s32 4, %v884
        %v886 = vrot.slane %v877, %v885
        %v889 = vlaneseq
        %v890 = vshrl.u32 %v889, 7
        %v891 = vsub.s32 0, %v890
        %v892 = vrot.slane %v882, %v891
        %v893 = vlaneseq
        %v894 = vshrl.u32 %v893, 7
        %v895 = vsub.s32 0, %v894
        %v896 = vrot.slane %v886, %v895
        %v897 = vmul.f32 %v868, %v892
        %v898 = vmul.f32 %v862, %v896
        %v899 = vmul.f32 %v869, %v892
        %v900 = vmul.f32 %v863, %v896
        %v901 = vmul.f32 %v870, %v892
        %v902 = vmul.f32 %v864, %v896
        %v903 = vmul.f32 %v871, %v892
        %v904 = vmul.f32 %v865, %v896
        %v905 = vmul.f32 %v872, %v892
        %v906 = vmul.f32 %v866, %v896
        %v907 = vmul.f32 %v873, %v892
        %v908 = vmul.f32 %v867, %v896
        %909 = vset.pattern.permute.xlu0 2
        %910 = vperm.xlu0 %909, %v479
        %v911 = vpop.permute.xlu0 %910
        %913 = vset.pattern.permute.xlu0 2
        %914 = vperm.xlu0 %913, %v480
        %v915 = vpop.permute.xlu0 %914
        %917 = vset.pattern.permute.xlu0 2
        %918 = vperm.xlu0 %917, %v481
        %v919 = vpop.permute.xlu0 %918
        %921 = vset.pattern.permute.xlu0 2
        %922 = vperm.xlu0 %921, %v482
        %v923 = vpop.permute.xlu0 %922
        %925 = vset.pattern.permute.xlu0 2
        %926 = vperm.xlu0 %925, %v483
        %v927 = vpop.permute.xlu0 %926
        %929 = vset.pattern.permute.xlu0 2
        %930 = vperm.xlu0 %929, %v484
        %v931 = vpop.permute.xlu0 %930
        %v933 = vmul.f32 %v911, %v897
        %v934 = vmul.f32 %v911, %v898
        %v935 = vmul.f32 %v915, %v899
        %v936 = vmul.f32 %v915, %v900
        %v937 = vmul.f32 %v919, %v901
        %v938 = vmul.f32 %v919, %v902
        %v939 = vmul.f32 %v923, %v903
        %v940 = vmul.f32 %v923, %v904
        %v941 = vmul.f32 %v927, %v905
        %v942 = vmul.f32 %v927, %v906
        %v943 = vmul.f32 %v931, %v907
        %v944 = vmul.f32 %v931, %v908
        %v945 = vadd.f32 %v777, %v933
        %v946 = vadd.f32 %v778, %v934
        %v947 = vadd.f32 %v779, %v935
        %v948 = vadd.f32 %v780, %v936
        %v949 = vadd.f32 %v781, %v937
        %v950 = vadd.f32 %v782, %v938
        %v951 = vadd.f32 %v783, %v939
        %v952 = vadd.f32 %v784, %v940
        %v953 = vadd.f32 %v785, %v941
        %v954 = vadd.f32 %v786, %v942
        %v955 = vadd.f32 %v787, %v943
        %v956 = vadd.f32 %v788, %v944
        %957 = vset.pattern.permute.xlu0 2
        %958 = vperm.xlu0 %957, %v485
        %v959 = vpop.permute.xlu0 %958
        %961 = vset.pattern.permute.xlu0 2
        %962 = vperm.xlu0 %961, %v486
        %v963 = vpop.permute.xlu0 %962
        %965 = vset.pattern.permute.xlu0 2
        %966 = vperm.xlu0 %965, %v487
        %v967 = vpop.permute.xlu0 %966
        %969 = vset.pattern.permute.xlu0 2
        %970 = vperm.xlu0 %969, %v488
        %v971 = vpop.permute.xlu0 %970
        %973 = vset.pattern.permute.xlu0 2
        %974 = vperm.xlu0 %973, %v489
        %v975 = vpop.permute.xlu0 %974
        %977 = vset.pattern.permute.xlu0 2
        %978 = vperm.xlu0 %977, %v490
        %v979 = vpop.permute.xlu0 %978
        %v981 = vmul.f32 %v959, %v897
        %v982 = vmul.f32 %v959, %v898
        %v983 = vmul.f32 %v963, %v899
        %v984 = vmul.f32 %v963, %v900
        %v985 = vmul.f32 %v967, %v901
        %v986 = vmul.f32 %v967, %v902
        %v987 = vmul.f32 %v971, %v903
        %v988 = vmul.f32 %v971, %v904
        %v989 = vmul.f32 %v975, %v905
        %v990 = vmul.f32 %v975, %v906
        %v991 = vmul.f32 %v979, %v907
        %v992 = vmul.f32 %v979, %v908
        %v993 = vadd.f32 %v825, %v981
        %v994 = vadd.f32 %v826, %v982
        %v995 = vadd.f32 %v827, %v983
        %v996 = vadd.f32 %v828, %v984
        %v997 = vadd.f32 %v829, %v985
        %v998 = vadd.f32 %v830, %v986
        %v999 = vadd.f32 %v831, %v987
        %v1000 = vadd.f32 %v832, %v988
        %v1001 = vadd.f32 %v833, %v989
        %v1002 = vadd.f32 %v834, %v990
        %v1003 = vadd.f32 %v835, %v991
        %v1004 = vadd.f32 %v836, %v992
        %1005 = vrot.lane.b32.xlu0 %v450, 1
        %v1006 = vpop.permute.xlu0 %1005
        %1007 = vrot.lane.b32.xlu0 %v454, 1
        %v1008 = vpop.permute.xlu0 %1007
        %1009 = vrot.lane.b32.xlu0 %v460, 1
        %v1010 = vpop.permute.xlu0 %1009
        %1011 = vrot.lane.b32.xlu0 %v464, 1
        %v1012 = vpop.permute.xlu0 %1011
        %1013 = vrot.lane.b32.xlu0 %v470, 1
        %v1014 = vpop.permute.xlu0 %1013
        %1015 = vrot.lane.b32.xlu0 %v474, 1
        %v1016 = vpop.permute.xlu0 %1015
        %1017 = vrot.lane.b32.xlu0 %v452, 1
        %v1018 = vpop.permute.xlu0 %1017
        %1019 = vrot.lane.b32.xlu0 %v456, 1
        %v1020 = vpop.permute.xlu0 %1019
        %1021 = vrot.lane.b32.xlu0 %v462, 1
        %v1022 = vpop.permute.xlu0 %1021
        %1023 = vrot.lane.b32.xlu0 %v466, 1
        %v1024 = vpop.permute.xlu0 %1023
        %1025 = vrot.lane.b32.xlu0 %v472, 1
        %v1026 = vpop.permute.xlu0 %1025
        %1027 = vrot.lane.b32.xlu0 %v476, 1
        %v1028 = vpop.permute.xlu0 %1027
        %vm1029 = vcmp.lt.s32.totalorder %v516, 1
        %v1030 = vsel %vm1029, %v1006, %v1018
        %v1031 = vsel %vm1029, %v1008, %v1020
        %v1032 = vsel %vm1029, %v1010, %v1022
        %v1033 = vsel %vm1029, %v1012, %v1024
        %v1034 = vsel %vm1029, %v1014, %v1026
        %v1035 = vsel %vm1029, %v1016, %v1028
        %v1036 = vsel %vm1029, %v1018, %v1006
        %v1037 = vsel %vm1029, %v1020, %v1008
        %v1038 = vsel %vm1029, %v1022, %v1010
        %v1039 = vsel %vm1029, %v1024, %v1012
        %v1040 = vsel %vm1029, %v1026, %v1014
        %v1041 = vsel %vm1029, %v1028, %v1016
        %v1042 = vlaneseq
        %v1043 = vshrl.u32 %v1042, 7
        %v1044 = vsub.s32 2, %v1043
        %v1045 = vrot.slane %v478, %v1044
        %v1046 = vlaneseq
        %v1047 = vshrl.u32 %v1046, 7
        %v1048 = vsub.s32 6, %v1047
        %v1049 = vrot.slane %v478, %v1048
        %v1052 = vlaneseq
        %v1053 = vshrl.u32 %v1052, 7
        %v1054 = vsub.s32 2, %v1053
        %v1055 = vrot.slane %v1045, %v1054
        %v1056 = vlaneseq
        %v1057 = vshrl.u32 %v1056, 7
        %v1058 = vsub.s32 2, %v1057
        %v1059 = vrot.slane %v1049, %v1058
        %v1060 = vmul.f32 %v1036, %v1055
        %v1061 = vmul.f32 %v1030, %v1059
        %v1062 = vmul.f32 %v1037, %v1055
        %v1063 = vmul.f32 %v1031, %v1059
        %v1064 = vmul.f32 %v1038, %v1055
        %v1065 = vmul.f32 %v1032, %v1059
        %v1066 = vmul.f32 %v1039, %v1055
        %v1067 = vmul.f32 %v1033, %v1059
        %v1068 = vmul.f32 %v1040, %v1055
        %v1069 = vmul.f32 %v1034, %v1059
        %v1070 = vmul.f32 %v1041, %v1055
        %v1071 = vmul.f32 %v1035, %v1059
        %1072 = vset.pattern.permute.xlu0 3
        %1073 = vperm.xlu0 %1072, %v479
        %v1074 = vpop.permute.xlu0 %1073
        %1076 = vset.pattern.permute.xlu0 3
        %1077 = vperm.xlu0 %1076, %v480
        %v1078 = vpop.permute.xlu0 %1077
        %1080 = vset.pattern.permute.xlu0 3
        %1081 = vperm.xlu0 %1080, %v481
        %v1082 = vpop.permute.xlu0 %1081
        %1084 = vset.pattern.permute.xlu0 3
        %1085 = vperm.xlu0 %1084, %v482
        %v1086 = vpop.permute.xlu0 %1085
        %1088 = vset.pattern.permute.xlu0 3
        %1089 = vperm.xlu0 %1088, %v483
        %v1090 = vpop.permute.xlu0 %1089
        %1092 = vset.pattern.permute.xlu0 3
        %1093 = vperm.xlu0 %1092, %v484
        %v1094 = vpop.permute.xlu0 %1093
        %v1096 = vmul.f32 %v1074, %v1060
        %v1097 = vmul.f32 %v1074, %v1061
        %v1098 = vmul.f32 %v1078, %v1062
        %v1099 = vmul.f32 %v1078, %v1063
        %v1100 = vmul.f32 %v1082, %v1064
        %v1101 = vmul.f32 %v1082, %v1065
        %v1102 = vmul.f32 %v1086, %v1066
        %v1103 = vmul.f32 %v1086, %v1067
        %v1104 = vmul.f32 %v1090, %v1068
        %v1105 = vmul.f32 %v1090, %v1069
        %v1106 = vmul.f32 %v1094, %v1070
        %v1107 = vmul.f32 %v1094, %v1071
        %v1108 = vadd.f32 %v945, %v1096
        %v1109 = vadd.f32 %v946, %v1097
        %v1110 = vadd.f32 %v947, %v1098
        %v1111 = vadd.f32 %v948, %v1099
        %v1112 = vadd.f32 %v949, %v1100
        %v1113 = vadd.f32 %v950, %v1101
        %v1114 = vadd.f32 %v951, %v1102
        %v1115 = vadd.f32 %v952, %v1103
        %v1116 = vadd.f32 %v953, %v1104
        %v1117 = vadd.f32 %v954, %v1105
        %v1118 = vadd.f32 %v955, %v1106
        %v1119 = vadd.f32 %v956, %v1107
        %1120 = vset.pattern.permute.xlu0 3
        %1121 = vperm.xlu0 %1120, %v485
        %v1122 = vpop.permute.xlu0 %1121
        %1124 = vset.pattern.permute.xlu0 3
        %1125 = vperm.xlu0 %1124, %v486
        %v1126 = vpop.permute.xlu0 %1125
        %1128 = vset.pattern.permute.xlu0 3
        %1129 = vperm.xlu0 %1128, %v487
        %v1130 = vpop.permute.xlu0 %1129
        %1132 = vset.pattern.permute.xlu0 3
        %1133 = vperm.xlu0 %1132, %v488
        %v1134 = vpop.permute.xlu0 %1133
        %1136 = vset.pattern.permute.xlu0 3
        %1137 = vperm.xlu0 %1136, %v489
        %v1138 = vpop.permute.xlu0 %1137
        %1140 = vset.pattern.permute.xlu0 3
        %1141 = vperm.xlu0 %1140, %v490
        %v1142 = vpop.permute.xlu0 %1141
        %v1144 = vmul.f32 %v1122, %v1060
        %v1145 = vmul.f32 %v1122, %v1061
        %v1146 = vmul.f32 %v1126, %v1062
        %v1147 = vmul.f32 %v1126, %v1063
        %v1148 = vmul.f32 %v1130, %v1064
        %v1149 = vmul.f32 %v1130, %v1065
        %v1150 = vmul.f32 %v1134, %v1066
        %v1151 = vmul.f32 %v1134, %v1067
        %v1152 = vmul.f32 %v1138, %v1068
        %v1153 = vmul.f32 %v1138, %v1069
        %v1154 = vmul.f32 %v1142, %v1070
        %v1155 = vmul.f32 %v1142, %v1071
        %v1156 = vadd.f32 %v993, %v1144
        %v1157 = vadd.f32 %v994, %v1145
        %v1158 = vadd.f32 %v995, %v1146
        %v1159 = vadd.f32 %v996, %v1147
        %v1160 = vadd.f32 %v997, %v1148
        %v1161 = vadd.f32 %v998, %v1149
        %v1162 = vadd.f32 %v999, %v1150
        %v1163 = vadd.f32 %v1000, %v1151
        %v1164 = vadd.f32 %v1001, %v1152
        %v1165 = vadd.f32 %v1002, %v1153
        %v1166 = vadd.f32 %v1003, %v1154
        %v1167 = vadd.f32 %v1004, %v1155
        %1168 = vset.pattern.permute.xlu0 4
        %1169 = vperm.xlu0 %1168, %v479
        %v1170 = vpop.permute.xlu0 %1169
        %1172 = vset.pattern.permute.xlu0 4
        %1173 = vperm.xlu0 %1172, %v480
        %v1174 = vpop.permute.xlu0 %1173
        %1176 = vset.pattern.permute.xlu0 4
        %1177 = vperm.xlu0 %1176, %v481
        %v1178 = vpop.permute.xlu0 %1177
        %1180 = vset.pattern.permute.xlu0 4
        %1181 = vperm.xlu0 %1180, %v482
        %v1182 = vpop.permute.xlu0 %1181
        %1184 = vset.pattern.permute.xlu0 4
        %1185 = vperm.xlu0 %1184, %v483
        %v1186 = vpop.permute.xlu0 %1185
        %1188 = vset.pattern.permute.xlu0 4
        %1189 = vperm.xlu0 %1188, %v484
        %v1190 = vpop.permute.xlu0 %1189
        %v1192 = vmul.f32 %v1170, %v450
        %v1193 = vmul.f32 %v1170, %v452
        %v1194 = vmul.f32 %v1174, %v454
        %v1195 = vmul.f32 %v1174, %v456
        %v1196 = vmul.f32 %v1178, %v460
        %v1197 = vmul.f32 %v1178, %v462
        %v1198 = vmul.f32 %v1182, %v464
        %v1199 = vmul.f32 %v1182, %v466
        %v1200 = vmul.f32 %v1186, %v470
        %v1201 = vmul.f32 %v1186, %v472
        %v1202 = vmul.f32 %v1190, %v474
        %v1203 = vmul.f32 %v1190, %v476
        %v1204 = vadd.f32 %v1108, %v1192
        %v1205 = vadd.f32 %v1109, %v1193
        %v1206 = vadd.f32 %v1110, %v1194
        %v1207 = vadd.f32 %v1111, %v1195
        %v1208 = vadd.f32 %v1112, %v1196
        %v1209 = vadd.f32 %v1113, %v1197
        %v1210 = vadd.f32 %v1114, %v1198
        %v1211 = vadd.f32 %v1115, %v1199
        %v1212 = vadd.f32 %v1116, %v1200
        %v1213 = vadd.f32 %v1117, %v1201
        %v1214 = vadd.f32 %v1118, %v1202
        %v1215 = vadd.f32 %v1119, %v1203
        %1216 = vset.pattern.permute.xlu0 4
        %1217 = vperm.xlu0 %1216, %v485
        %v1218 = vpop.permute.xlu0 %1217
        %1220 = vset.pattern.permute.xlu0 4
        %1221 = vperm.xlu0 %1220, %v486
        %v1222 = vpop.permute.xlu0 %1221
        %1224 = vset.pattern.permute.xlu0 4
        %1225 = vperm.xlu0 %1224, %v487
        %v1226 = vpop.permute.xlu0 %1225
        %1228 = vset.pattern.permute.xlu0 4
        %1229 = vperm.xlu0 %1228, %v488
        %v1230 = vpop.permute.xlu0 %1229
        %1232 = vset.pattern.permute.xlu0 4
        %1233 = vperm.xlu0 %1232, %v489
        %v1234 = vpop.permute.xlu0 %1233
        %1236 = vset.pattern.permute.xlu0 4
        %1237 = vperm.xlu0 %1236, %v490
        %v1238 = vpop.permute.xlu0 %1237
        %v1240 = vmul.f32 %v1218, %v450
        %v1241 = vmul.f32 %v1218, %v452
        %v1242 = vmul.f32 %v1222, %v454
        %v1243 = vmul.f32 %v1222, %v456
        %v1244 = vmul.f32 %v1226, %v460
        %v1245 = vmul.f32 %v1226, %v462
        %v1246 = vmul.f32 %v1230, %v464
        %v1247 = vmul.f32 %v1230, %v466
        %v1248 = vmul.f32 %v1234, %v470
        %v1249 = vmul.f32 %v1234, %v472
        %v1250 = vmul.f32 %v1238, %v474
        %v1251 = vmul.f32 %v1238, %v476
        %v1252 = vadd.f32 %v1156, %v1240
        %v1253 = vadd.f32 %v1157, %v1241
        %v1254 = vadd.f32 %v1158, %v1242
        %v1255 = vadd.f32 %v1159, %v1243
        %v1256 = vadd.f32 %v1160, %v1244
        %v1257 = vadd.f32 %v1161, %v1245
        %v1258 = vadd.f32 %v1162, %v1246
        %v1259 = vadd.f32 %v1163, %v1247
        %v1260 = vadd.f32 %v1164, %v1248
        %v1261 = vadd.f32 %v1165, %v1249
        %v1262 = vadd.f32 %v1166, %v1250
        %v1263 = vadd.f32 %v1167, %v1251
        %1264 = vrot.lane.b32.xlu0 %v450, 127
        %v1265 = vpop.permute.xlu0 %1264
        %1266 = vrot.lane.b32.xlu0 %v454, 127
        %v1267 = vpop.permute.xlu0 %1266
        %1268 = vrot.lane.b32.xlu0 %v460, 127
        %v1269 = vpop.permute.xlu0 %1268
        %1270 = vrot.lane.b32.xlu0 %v464, 127
        %v1271 = vpop.permute.xlu0 %1270
        %1272 = vrot.lane.b32.xlu0 %v470, 127
        %v1273 = vpop.permute.xlu0 %1272
        %1274 = vrot.lane.b32.xlu0 %v474, 127
        %v1275 = vpop.permute.xlu0 %1274
        %1276 = vrot.lane.b32.xlu0 %v452, 127
        %v1277 = vpop.permute.xlu0 %1276
        %1278 = vrot.lane.b32.xlu0 %v456, 127
        %v1279 = vpop.permute.xlu0 %1278
        %1280 = vrot.lane.b32.xlu0 %v462, 127
        %v1281 = vpop.permute.xlu0 %1280
        %1282 = vrot.lane.b32.xlu0 %v466, 127
        %v1283 = vpop.permute.xlu0 %1282
        %1284 = vrot.lane.b32.xlu0 %v472, 127
        %v1285 = vpop.permute.xlu0 %1284
        %1286 = vrot.lane.b32.xlu0 %v476, 127
        %v1287 = vpop.permute.xlu0 %1286
        %vm1288 = vcmp.lt.s32.totalorder %v516, 127
        %v1289 = vsel %vm1288, %v1265, %v1277
        %v1290 = vsel %vm1288, %v1267, %v1279
        %v1291 = vsel %vm1288, %v1269, %v1281
        %v1292 = vsel %vm1288, %v1271, %v1283
        %v1293 = vsel %vm1288, %v1273, %v1285
        %v1294 = vsel %vm1288, %v1275, %v1287
        %v1295 = vsel %vm1288, %v1277, %v1265
        %v1296 = vsel %vm1288, %v1279, %v1267
        %v1297 = vsel %vm1288, %v1281, %v1269
        %v1298 = vsel %vm1288, %v1283, %v1271
        %v1299 = vsel %vm1288, %v1285, %v1273
        %v1300 = vsel %vm1288, %v1287, %v1275
        %v1301 = vlaneseq
        %v1302 = vshrl.u32 %v1301, 7
        %v1303 = vsub.s32 3, %v1302
        %v1304 = vrot.slane %v478, %v1303
        %v1305 = vlaneseq
        %v1306 = vshrl.u32 %v1305, 7
        %v1307 = vsub.s32 7, %v1306
        %v1308 = vrot.slane %v478, %v1307
        %v1311 = vlaneseq
        %v1312 = vshrl.u32 %v1311, 7
        %v1313 = vsub.s32 3, %v1312
        %v1314 = vrot.slane %v1304, %v1313
        %v1315 = vlaneseq
        %v1316 = vshrl.u32 %v1315, 7
        %v1317 = vsub.s32 3, %v1316
        %v1318 = vrot.slane %v1308, %v1317
        %v1319 = vmul.f32 %v1289, %v1314
        %v1320 = vmul.f32 %v1295, %v1318
        %v1321 = vmul.f32 %v1290, %v1314
        %v1322 = vmul.f32 %v1296, %v1318
        %v1323 = vmul.f32 %v1291, %v1314
        %v1324 = vmul.f32 %v1297, %v1318
        %v1325 = vmul.f32 %v1292, %v1314
        %v1326 = vmul.f32 %v1298, %v1318
        %v1327 = vmul.f32 %v1293, %v1314
        %v1328 = vmul.f32 %v1299, %v1318
        %v1329 = vmul.f32 %v1294, %v1314
        %v1330 = vmul.f32 %v1300, %v1318
        %1331 = vset.pattern.permute.xlu0 5
        %1332 = vperm.xlu0 %1331, %v479
        %v1333 = vpop.permute.xlu0 %1332
        %1335 = vset.pattern.permute.xlu0 5
        %1336 = vperm.xlu0 %1335, %v480
        %v1337 = vpop.permute.xlu0 %1336
        %1339 = vset.pattern.permute.xlu0 5
        %1340 = vperm.xlu0 %1339, %v481
        %v1341 = vpop.permute.xlu0 %1340
        %1343 = vset.pattern.permute.xlu0 5
        %1344 = vperm.xlu0 %1343, %v482
        %v1345 = vpop.permute.xlu0 %1344
        %1347 = vset.pattern.permute.xlu0 5
        %1348 = vperm.xlu0 %1347, %v483
        %v1349 = vpop.permute.xlu0 %1348
        %1351 = vset.pattern.permute.xlu0 5
        %1352 = vperm.xlu0 %1351, %v484
        %v1353 = vpop.permute.xlu0 %1352
        %v1355 = vmul.f32 %v1333, %v1319
        %v1356 = vmul.f32 %v1333, %v1320
        %v1357 = vmul.f32 %v1337, %v1321
        %v1358 = vmul.f32 %v1337, %v1322
        %v1359 = vmul.f32 %v1341, %v1323
        %v1360 = vmul.f32 %v1341, %v1324
        %v1361 = vmul.f32 %v1345, %v1325
        %v1362 = vmul.f32 %v1345, %v1326
        %v1363 = vmul.f32 %v1349, %v1327
        %v1364 = vmul.f32 %v1349, %v1328
        %v1365 = vmul.f32 %v1353, %v1329
        %v1366 = vmul.f32 %v1353, %v1330
        %v1367 = vadd.f32 %v1204, %v1355
        %v1368 = vadd.f32 %v1205, %v1356
        %v1369 = vadd.f32 %v1206, %v1357
        %v1370 = vadd.f32 %v1207, %v1358
        %v1371 = vadd.f32 %v1208, %v1359
        %v1372 = vadd.f32 %v1209, %v1360
        %v1373 = vadd.f32 %v1210, %v1361
        %v1374 = vadd.f32 %v1211, %v1362
        %v1375 = vadd.f32 %v1212, %v1363
        %v1376 = vadd.f32 %v1213, %v1364
        %v1377 = vadd.f32 %v1214, %v1365
        %v1378 = vadd.f32 %v1215, %v1366
        %1379 = vset.pattern.permute.xlu0 5
        %1380 = vperm.xlu0 %1379, %v485
        %v1381 = vpop.permute.xlu0 %1380
        %1383 = vset.pattern.permute.xlu0 5
        %1384 = vperm.xlu0 %1383, %v486
        %v1385 = vpop.permute.xlu0 %1384
        %1387 = vset.pattern.permute.xlu0 5
        %1388 = vperm.xlu0 %1387, %v487
        %v1389 = vpop.permute.xlu0 %1388
        %1391 = vset.pattern.permute.xlu0 5
        %1392 = vperm.xlu0 %1391, %v488
        %v1393 = vpop.permute.xlu0 %1392
        %1395 = vset.pattern.permute.xlu0 5
        %1396 = vperm.xlu0 %1395, %v489
        %v1397 = vpop.permute.xlu0 %1396
        %1399 = vset.pattern.permute.xlu0 5
        %1400 = vperm.xlu0 %1399, %v490
        %v1401 = vpop.permute.xlu0 %1400
        %v1403 = vmul.f32 %v1381, %v1319
        %v1404 = vmul.f32 %v1381, %v1320
        %v1405 = vmul.f32 %v1385, %v1321
        %v1406 = vmul.f32 %v1385, %v1322
        %v1407 = vmul.f32 %v1389, %v1323
        %v1408 = vmul.f32 %v1389, %v1324
        %v1409 = vmul.f32 %v1393, %v1325
        %v1410 = vmul.f32 %v1393, %v1326
        %v1411 = vmul.f32 %v1397, %v1327
        %v1412 = vmul.f32 %v1397, %v1328
        %v1413 = vmul.f32 %v1401, %v1329
        %v1414 = vmul.f32 %v1401, %v1330
        %v1415 = vadd.f32 %v1252, %v1403
        %v1416 = vadd.f32 %v1253, %v1404
        %v1417 = vadd.f32 %v1254, %v1405
        %v1418 = vadd.f32 %v1255, %v1406
        %v1419 = vadd.f32 %v1256, %v1407
        %v1420 = vadd.f32 %v1257, %v1408
        %v1421 = vadd.f32 %v1258, %v1409
        %v1422 = vadd.f32 %v1259, %v1410
        %v1423 = vadd.f32 %v1260, %v1411
        %v1424 = vadd.f32 %v1261, %v1412
        %v1425 = vadd.f32 %v1262, %v1413
        %v1426 = vadd.f32 %v1263, %v1414
        %1427 = vrot.lane.b32.xlu0 %v450, 113
        %v1428 = vpop.permute.xlu0 %1427
        %1429 = vrot.lane.b32.xlu0 %v454, 113
        %v1430 = vpop.permute.xlu0 %1429
        %1431 = vrot.lane.b32.xlu0 %v460, 113
        %v1432 = vpop.permute.xlu0 %1431
        %1433 = vrot.lane.b32.xlu0 %v464, 113
        %v1434 = vpop.permute.xlu0 %1433
        %1435 = vrot.lane.b32.xlu0 %v470, 113
        %v1436 = vpop.permute.xlu0 %1435
        %1437 = vrot.lane.b32.xlu0 %v474, 113
        %v1438 = vpop.permute.xlu0 %1437
        %1439 = vrot.lane.b32.xlu0 %v452, 113
        %v1440 = vpop.permute.xlu0 %1439
        %1441 = vrot.lane.b32.xlu0 %v456, 113
        %v1442 = vpop.permute.xlu0 %1441
        %1443 = vrot.lane.b32.xlu0 %v462, 113
        %v1444 = vpop.permute.xlu0 %1443
        %1445 = vrot.lane.b32.xlu0 %v466, 113
        %v1446 = vpop.permute.xlu0 %1445
        %1447 = vrot.lane.b32.xlu0 %v472, 113
        %v1448 = vpop.permute.xlu0 %1447
        %1449 = vrot.lane.b32.xlu0 %v476, 113
        %v1450 = vpop.permute.xlu0 %1449
        %vm1451 = vcmp.lt.s32.totalorder %v516, 113
        %v1452 = vsel %vm1451, %v1428, %v1440
        %v1453 = vsel %vm1451, %v1430, %v1442
        %v1454 = vsel %vm1451, %v1432, %v1444
        %v1455 = vsel %vm1451, %v1434, %v1446
        %v1456 = vsel %vm1451, %v1436, %v1448
        %v1457 = vsel %vm1451, %v1438, %v1450
        %v1458 = vsel %vm1451, %v1440, %v1428
        %v1459 = vsel %vm1451, %v1442, %v1430
        %v1460 = vsel %vm1451, %v1444, %v1432
        %v1461 = vsel %vm1451, %v1446, %v1434
        %v1462 = vsel %vm1451, %v1448, %v1436
        %v1463 = vsel %vm1451, %v1450, %v1438
        %v1464 = vrot.slane %v478, 5
        %v1465 = vrot.slane %v1464, 4
        %v1467 = vmul.f32 %v478, %v1465
        %v1469 = vlaneseq
        %v1470 = vshrl.u32 %v1469, 7
        %v1471 = vsub.s32 1, %v1470
        %v1472 = vrot.slane %v1467, %v1471
        %v1473 = vlaneseq
        %v1474 = vshrl.u32 %v1473, 7
        %v1475 = vsub.s32 5, %v1474
        %v1476 = vrot.slane %v1467, %v1475
        %v1479 = vlaneseq
        %v1480 = vshrl.u32 %v1479, 7
        %v1481 = vsub.s32 1, %v1480
        %v1482 = vrot.slane %v1472, %v1481
        %v1483 = vlaneseq
        %v1484 = vshrl.u32 %v1483, 7
        %v1485 = vsub.s32 1, %v1484
        %v1486 = vrot.slane %v1476, %v1485
        %v1487 = vmul.f32 %v1452, %v1482
        %v1488 = vmul.f32 %v1458, %v1486
        %v1489 = vmul.f32 %v1453, %v1482
        %v1490 = vmul.f32 %v1459, %v1486
        %v1491 = vmul.f32 %v1454, %v1482
        %v1492 = vmul.f32 %v1460, %v1486
        %v1493 = vmul.f32 %v1455, %v1482
        %v1494 = vmul.f32 %v1461, %v1486
        %v1495 = vmul.f32 %v1456, %v1482
        %v1496 = vmul.f32 %v1462, %v1486
        %v1497 = vmul.f32 %v1457, %v1482
        %v1498 = vmul.f32 %v1463, %v1486
        %1499 = vset.pattern.permute.xlu0 6
        %1500 = vperm.xlu0 %1499, %v479
        %v1501 = vpop.permute.xlu0 %1500
        %1503 = vset.pattern.permute.xlu0 6
        %1504 = vperm.xlu0 %1503, %v480
        %v1505 = vpop.permute.xlu0 %1504
        %1507 = vset.pattern.permute.xlu0 6
        %1508 = vperm.xlu0 %1507, %v481
        %v1509 = vpop.permute.xlu0 %1508
        %1511 = vset.pattern.permute.xlu0 6
        %1512 = vperm.xlu0 %1511, %v482
        %v1513 = vpop.permute.xlu0 %1512
        %1515 = vset.pattern.permute.xlu0 6
        %1516 = vperm.xlu0 %1515, %v483
        %v1517 = vpop.permute.xlu0 %1516
        %1519 = vset.pattern.permute.xlu0 6
        %1520 = vperm.xlu0 %1519, %v484
        %v1521 = vpop.permute.xlu0 %1520
        %v1523 = vmul.f32 %v1501, %v1487
        %v1524 = vmul.f32 %v1501, %v1488
        %v1525 = vmul.f32 %v1505, %v1489
        %v1526 = vmul.f32 %v1505, %v1490
        %v1527 = vmul.f32 %v1509, %v1491
        %v1528 = vmul.f32 %v1509, %v1492
        %v1529 = vmul.f32 %v1513, %v1493
        %v1530 = vmul.f32 %v1513, %v1494
        %v1531 = vmul.f32 %v1517, %v1495
        %v1532 = vmul.f32 %v1517, %v1496
        %v1533 = vmul.f32 %v1521, %v1497
        %v1534 = vmul.f32 %v1521, %v1498
        %v1535 = vadd.f32 %v1367, %v1523
        %v1536 = vadd.f32 %v1368, %v1524
        %v1537 = vadd.f32 %v1369, %v1525
        %v1538 = vadd.f32 %v1370, %v1526
        %v1539 = vadd.f32 %v1371, %v1527
        %v1540 = vadd.f32 %v1372, %v1528
        %v1541 = vadd.f32 %v1373, %v1529
        %v1542 = vadd.f32 %v1374, %v1530
        %v1543 = vadd.f32 %v1375, %v1531
        %v1544 = vadd.f32 %v1376, %v1532
        %v1545 = vadd.f32 %v1377, %v1533
        %v1546 = vadd.f32 %v1378, %v1534
        %1547 = vset.pattern.permute.xlu0 6
        %1548 = vperm.xlu0 %1547, %v485
        %v1549 = vpop.permute.xlu0 %1548
        %1551 = vset.pattern.permute.xlu0 6
        %1552 = vperm.xlu0 %1551, %v486
        %v1553 = vpop.permute.xlu0 %1552
        %1555 = vset.pattern.permute.xlu0 6
        %1556 = vperm.xlu0 %1555, %v487
        %v1557 = vpop.permute.xlu0 %1556
        %1559 = vset.pattern.permute.xlu0 6
        %1560 = vperm.xlu0 %1559, %v488
        %v1561 = vpop.permute.xlu0 %1560
        %1563 = vset.pattern.permute.xlu0 6
        %1564 = vperm.xlu0 %1563, %v489
        %v1565 = vpop.permute.xlu0 %1564
        %1567 = vset.pattern.permute.xlu0 6
        %1568 = vperm.xlu0 %1567, %v490
        %v1569 = vpop.permute.xlu0 %1568
        %v1571 = vmul.f32 %v1549, %v1487
        %v1572 = vmul.f32 %v1549, %v1488
        %v1573 = vmul.f32 %v1553, %v1489
        %v1574 = vmul.f32 %v1553, %v1490
        %v1575 = vmul.f32 %v1557, %v1491
        %v1576 = vmul.f32 %v1557, %v1492
        %v1577 = vmul.f32 %v1561, %v1493
        %v1578 = vmul.f32 %v1561, %v1494
        %v1579 = vmul.f32 %v1565, %v1495
        %v1580 = vmul.f32 %v1565, %v1496
        %v1581 = vmul.f32 %v1569, %v1497
        %v1582 = vmul.f32 %v1569, %v1498
        %v1583 = vadd.f32 %v1415, %v1571
        %v1584 = vadd.f32 %v1416, %v1572
        %v1585 = vadd.f32 %v1417, %v1573
        %v1586 = vadd.f32 %v1418, %v1574
        %v1587 = vadd.f32 %v1419, %v1575
        %v1588 = vadd.f32 %v1420, %v1576
        %v1589 = vadd.f32 %v1421, %v1577
        %v1590 = vadd.f32 %v1422, %v1578
        %v1591 = vadd.f32 %v1423, %v1579
        %v1592 = vadd.f32 %v1424, %v1580
        %v1593 = vadd.f32 %v1425, %v1581
        %v1594 = vadd.f32 %v1426, %v1582
        %1595 = vrot.lane.b32.xlu0 %v450, 112
        %v1596 = vpop.permute.xlu0 %1595
        %1597 = vrot.lane.b32.xlu0 %v454, 112
        %v1598 = vpop.permute.xlu0 %1597
        %1599 = vrot.lane.b32.xlu0 %v460, 112
        %v1600 = vpop.permute.xlu0 %1599
        %1601 = vrot.lane.b32.xlu0 %v464, 112
        %v1602 = vpop.permute.xlu0 %1601
        %1603 = vrot.lane.b32.xlu0 %v470, 112
        %v1604 = vpop.permute.xlu0 %1603
        %1605 = vrot.lane.b32.xlu0 %v474, 112
        %v1606 = vpop.permute.xlu0 %1605
        %1607 = vrot.lane.b32.xlu0 %v452, 112
        %v1608 = vpop.permute.xlu0 %1607
        %1609 = vrot.lane.b32.xlu0 %v456, 112
        %v1610 = vpop.permute.xlu0 %1609
        %1611 = vrot.lane.b32.xlu0 %v462, 112
        %v1612 = vpop.permute.xlu0 %1611
        %1613 = vrot.lane.b32.xlu0 %v466, 112
        %v1614 = vpop.permute.xlu0 %1613
        %1615 = vrot.lane.b32.xlu0 %v472, 112
        %v1616 = vpop.permute.xlu0 %1615
        %1617 = vrot.lane.b32.xlu0 %v476, 112
        %v1618 = vpop.permute.xlu0 %1617
        %vm1619 = vcmp.lt.s32.totalorder %v516, 112
        %v1620 = vsel %vm1619, %v1596, %v1608
        %v1621 = vsel %vm1619, %v1598, %v1610
        %v1622 = vsel %vm1619, %v1600, %v1612
        %v1623 = vsel %vm1619, %v1602, %v1614
        %v1624 = vsel %vm1619, %v1604, %v1616
        %v1625 = vsel %vm1619, %v1606, %v1618
        %v1626 = vsel %vm1619, %v1608, %v1596
        %v1627 = vsel %vm1619, %v1610, %v1598
        %v1628 = vsel %vm1619, %v1612, %v1600
        %v1629 = vsel %vm1619, %v1614, %v1602
        %v1630 = vsel %vm1619, %v1616, %v1604
        %v1631 = vsel %vm1619, %v1618, %v1606
        %v1632 = vlaneseq
        %v1633 = vshrl.u32 %v1632, 7
        %v1634 = vsub.s32 1, %v1633
        %v1635 = vrot.slane %v478, %v1634
        %v1636 = vlaneseq
        %v1637 = vshrl.u32 %v1636, 7
        %v1638 = vsub.s32 5, %v1637
        %v1639 = vrot.slane %v478, %v1638
        %v1642 = vlaneseq
        %v1643 = vshrl.u32 %v1642, 7
        %v1644 = vsub.s32 1, %v1643
        %v1645 = vrot.slane %v1635, %v1644
        %v1646 = vlaneseq
        %v1647 = vshrl.u32 %v1646, 7
        %v1648 = vsub.s32 1, %v1647
        %v1649 = vrot.slane %v1639, %v1648
        %v1650 = vmul.f32 %v1620, %v1645
        %v1651 = vmul.f32 %v1626, %v1649
        %v1652 = vmul.f32 %v1621, %v1645
        %v1653 = vmul.f32 %v1627, %v1649
        %v1654 = vmul.f32 %v1622, %v1645
        %v1655 = vmul.f32 %v1628, %v1649
        %v1656 = vmul.f32 %v1623, %v1645
        %v1657 = vmul.f32 %v1629, %v1649
        %v1658 = vmul.f32 %v1624, %v1645
        %v1659 = vmul.f32 %v1630, %v1649
        %v1660 = vmul.f32 %v1625, %v1645
        %v1661 = vmul.f32 %v1631, %v1649
        %1662 = vset.pattern.permute.xlu0 7
        %1663 = vperm.xlu0 %1662, %v479
        %v1664 = vpop.permute.xlu0 %1663
        %1666 = vset.pattern.permute.xlu0 7
        %1667 = vperm.xlu0 %1666, %v480
        %v1668 = vpop.permute.xlu0 %1667
        %1670 = vset.pattern.permute.xlu0 7
        %1671 = vperm.xlu0 %1670, %v481
        %v1672 = vpop.permute.xlu0 %1671
        %1674 = vset.pattern.permute.xlu0 7
        %1675 = vperm.xlu0 %1674, %v482
        %v1676 = vpop.permute.xlu0 %1675
        %1678 = vset.pattern.permute.xlu0 7
        %1679 = vperm.xlu0 %1678, %v483
        %v1680 = vpop.permute.xlu0 %1679
        %1682 = vset.pattern.permute.xlu0 7
        %1683 = vperm.xlu0 %1682, %v484
        %v1684 = vpop.permute.xlu0 %1683
        %v1686 = vmul.f32 %v1664, %v1650
        %v1687 = vmul.f32 %v1664, %v1651
        %v1688 = vmul.f32 %v1668, %v1652
        %v1689 = vmul.f32 %v1668, %v1653
        %v1690 = vmul.f32 %v1672, %v1654
        %v1691 = vmul.f32 %v1672, %v1655
        %v1692 = vmul.f32 %v1676, %v1656
        %v1693 = vmul.f32 %v1676, %v1657
        %v1694 = vmul.f32 %v1680, %v1658
        %v1695 = vmul.f32 %v1680, %v1659
        %v1696 = vmul.f32 %v1684, %v1660
        %v1697 = vmul.f32 %v1684, %v1661
        %v1698 = vadd.f32 %v1535, %v1686
        %v1699 = vadd.f32 %v1536, %v1687
        %v1700 = vadd.f32 %v1537, %v1688
        %v1701 = vadd.f32 %v1538, %v1689
        %v1702 = vadd.f32 %v1539, %v1690
        %v1703 = vadd.f32 %v1540, %v1691
        %v1704 = vadd.f32 %v1541, %v1692
        %v1705 = vadd.f32 %v1542, %v1693
        %v1706 = vadd.f32 %v1543, %v1694
        %v1707 = vadd.f32 %v1544, %v1695
        %v1708 = vadd.f32 %v1545, %v1696
        %v1709 = vadd.f32 %v1546, %v1697
        %1710 = vset.pattern.permute.xlu0 7
        %1711 = vperm.xlu0 %1710, %v485
        %v1712 = vpop.permute.xlu0 %1711
        %1714 = vset.pattern.permute.xlu0 7
        %1715 = vperm.xlu0 %1714, %v486
        %v1716 = vpop.permute.xlu0 %1715
        %1718 = vset.pattern.permute.xlu0 7
        %1719 = vperm.xlu0 %1718, %v487
        %v1720 = vpop.permute.xlu0 %1719
        %1722 = vset.pattern.permute.xlu0 7
        %1723 = vperm.xlu0 %1722, %v488
        %v1724 = vpop.permute.xlu0 %1723
        %1726 = vset.pattern.permute.xlu0 7
        %1727 = vperm.xlu0 %1726, %v489
        %v1728 = vpop.permute.xlu0 %1727
        %1730 = vset.pattern.permute.xlu0 7
        %1731 = vperm.xlu0 %1730, %v490
        %v1732 = vpop.permute.xlu0 %1731
        %v1734 = vmul.f32 %v1712, %v1650
        %v1735 = vmul.f32 %v1712, %v1651
        %v1736 = vmul.f32 %v1716, %v1652
        %v1737 = vmul.f32 %v1716, %v1653
        %v1738 = vmul.f32 %v1720, %v1654
        %v1739 = vmul.f32 %v1720, %v1655
        %v1740 = vmul.f32 %v1724, %v1656
        %v1741 = vmul.f32 %v1724, %v1657
        %v1742 = vmul.f32 %v1728, %v1658
        %v1743 = vmul.f32 %v1728, %v1659
        %v1744 = vmul.f32 %v1732, %v1660
        %v1745 = vmul.f32 %v1732, %v1661
        %v1746 = vadd.f32 %v1583, %v1734
        %v1747 = vadd.f32 %v1584, %v1735
        %v1748 = vadd.f32 %v1585, %v1736
        %v1749 = vadd.f32 %v1586, %v1737
        %v1750 = vadd.f32 %v1587, %v1738
        %v1751 = vadd.f32 %v1588, %v1739
        %v1752 = vadd.f32 %v1589, %v1740
        %v1753 = vadd.f32 %v1590, %v1741
        %v1754 = vadd.f32 %v1591, %v1742
        %v1755 = vadd.f32 %v1592, %v1743
        %v1756 = vadd.f32 %v1593, %v1744
        %v1757 = vadd.f32 %v1594, %v1745
        %1758 = vrot.lane.b32.xlu0 %v450, 111
        %v1759 = vpop.permute.xlu0 %1758
        %1760 = vrot.lane.b32.xlu0 %v454, 111
        %v1761 = vpop.permute.xlu0 %1760
        %1762 = vrot.lane.b32.xlu0 %v460, 111
        %v1763 = vpop.permute.xlu0 %1762
        %1764 = vrot.lane.b32.xlu0 %v464, 111
        %v1765 = vpop.permute.xlu0 %1764
        %1766 = vrot.lane.b32.xlu0 %v470, 111
        %v1767 = vpop.permute.xlu0 %1766
        %1768 = vrot.lane.b32.xlu0 %v474, 111
        %v1769 = vpop.permute.xlu0 %1768
        %1770 = vrot.lane.b32.xlu0 %v452, 111
        %v1771 = vpop.permute.xlu0 %1770
        %1772 = vrot.lane.b32.xlu0 %v456, 111
        %v1773 = vpop.permute.xlu0 %1772
        %1774 = vrot.lane.b32.xlu0 %v462, 111
        %v1775 = vpop.permute.xlu0 %1774
        %1776 = vrot.lane.b32.xlu0 %v466, 111
        %v1777 = vpop.permute.xlu0 %1776
        %1778 = vrot.lane.b32.xlu0 %v472, 111
        %v1779 = vpop.permute.xlu0 %1778
        %1780 = vrot.lane.b32.xlu0 %v476, 111
        %v1781 = vpop.permute.xlu0 %1780
        %vm1782 = vcmp.lt.s32.totalorder %v516, 111
        %v1783 = vsel %vm1782, %v1759, %v1771
        %v1784 = vsel %vm1782, %v1761, %v1773
        %v1785 = vsel %vm1782, %v1763, %v1775
        %v1786 = vsel %vm1782, %v1765, %v1777
        %v1787 = vsel %vm1782, %v1767, %v1779
        %v1788 = vsel %vm1782, %v1769, %v1781
        %v1789 = vsel %vm1782, %v1771, %v1759
        %v1790 = vsel %vm1782, %v1773, %v1761
        %v1791 = vsel %vm1782, %v1775, %v1763
        %v1792 = vsel %vm1782, %v1777, %v1765
        %v1793 = vsel %vm1782, %v1779, %v1767
        %v1794 = vsel %vm1782, %v1781, %v1769
        %v1795 = vlaneseq
        %v1796 = vshrl.u32 %v1795, 7
        %v1797 = vsub.s32 1, %v1796
        %v1798 = vrot.slane %v534, %v1797
        %v1799 = vlaneseq
        %v1800 = vshrl.u32 %v1799, 7
        %v1801 = vsub.s32 5, %v1800
        %v1802 = vrot.slane %v534, %v1801
        %v1805 = vlaneseq
        %v1806 = vshrl.u32 %v1805, 7
        %v1807 = vsub.s32 1, %v1806
        %v1808 = vrot.slane %v1798, %v1807
        %v1809 = vlaneseq
        %v1810 = vshrl.u32 %v1809, 7
        %v1811 = vsub.s32 1, %v1810
        %v1812 = vrot.slane %v1802, %v1811
        %v1813 = vmul.f32 %v1783, %v1808
        %v1814 = vmul.f32 %v1789, %v1812
        %v1815 = vmul.f32 %v1784, %v1808
        %v1816 = vmul.f32 %v1790, %v1812
        %v1817 = vmul.f32 %v1785, %v1808
        %v1818 = vmul.f32 %v1791, %v1812
        %v1819 = vmul.f32 %v1786, %v1808
        %v1820 = vmul.f32 %v1792, %v1812
        %v1821 = vmul.f32 %v1787, %v1808
        %v1822 = vmul.f32 %v1793, %v1812
        %v1823 = vmul.f32 %v1788, %v1808
        %v1824 = vmul.f32 %v1794, %v1812
        %1825 = vset.pattern.permute.xlu0 8
        %1826 = vperm.xlu0 %1825, %v479
        %v1827 = vpop.permute.xlu0 %1826
        %1829 = vset.pattern.permute.xlu0 8
        %1830 = vperm.xlu0 %1829, %v480
        %v1831 = vpop.permute.xlu0 %1830
        %1833 = vset.pattern.permute.xlu0 8
        %1834 = vperm.xlu0 %1833, %v481
        %v1835 = vpop.permute.xlu0 %1834
        %1837 = vset.pattern.permute.xlu0 8
        %1838 = vperm.xlu0 %1837, %v482
        %v1839 = vpop.permute.xlu0 %1838
        %1841 = vset.pattern.permute.xlu0 8
        %1842 = vperm.xlu0 %1841, %v483
        %v1843 = vpop.permute.xlu0 %1842
        %1845 = vset.pattern.permute.xlu0 8
        %1846 = vperm.xlu0 %1845, %v484
        %v1847 = vpop.permute.xlu0 %1846
        %v1849 = vmul.f32 %v1827, %v1813
        %v1850 = vmul.f32 %v1827, %v1814
        %v1851 = vmul.f32 %v1831, %v1815
        %v1852 = vmul.f32 %v1831, %v1816
        %v1853 = vmul.f32 %v1835, %v1817
        %v1854 = vmul.f32 %v1835, %v1818
        %v1855 = vmul.f32 %v1839, %v1819
        %v1856 = vmul.f32 %v1839, %v1820
        %v1857 = vmul.f32 %v1843, %v1821
        %v1858 = vmul.f32 %v1843, %v1822
        %v1859 = vmul.f32 %v1847, %v1823
        %v1860 = vmul.f32 %v1847, %v1824
        %v1861 = vadd.f32 %v1698, %v1849
        %v1862 = vadd.f32 %v1699, %v1850
        %v1863 = vadd.f32 %v1700, %v1851
        %v1864 = vadd.f32 %v1701, %v1852
        %v1865 = vadd.f32 %v1702, %v1853
        %v1866 = vadd.f32 %v1703, %v1854
        %v1867 = vadd.f32 %v1704, %v1855
        %v1868 = vadd.f32 %v1705, %v1856
        %v1869 = vadd.f32 %v1706, %v1857
        %v1870 = vadd.f32 %v1707, %v1858
        %v1871 = vadd.f32 %v1708, %v1859
        %v1872 = vadd.f32 %v1709, %v1860
        %1873 = vset.pattern.permute.xlu0 8
        %1874 = vperm.xlu0 %1873, %v485
        %v1875 = vpop.permute.xlu0 %1874
        %1877 = vset.pattern.permute.xlu0 8
        %1878 = vperm.xlu0 %1877, %v486
        %v1879 = vpop.permute.xlu0 %1878
        %1881 = vset.pattern.permute.xlu0 8
        %1882 = vperm.xlu0 %1881, %v487
        %v1883 = vpop.permute.xlu0 %1882
        %1885 = vset.pattern.permute.xlu0 8
        %1886 = vperm.xlu0 %1885, %v488
        %v1887 = vpop.permute.xlu0 %1886
        %1889 = vset.pattern.permute.xlu0 8
        %1890 = vperm.xlu0 %1889, %v489
        %v1891 = vpop.permute.xlu0 %1890
        %1893 = vset.pattern.permute.xlu0 8
        %1894 = vperm.xlu0 %1893, %v490
        %v1895 = vpop.permute.xlu0 %1894
        %v1897 = vmul.f32 %v1875, %v1813
        %v1898 = vmul.f32 %v1875, %v1814
        %v1899 = vmul.f32 %v1879, %v1815
        %v1900 = vmul.f32 %v1879, %v1816
        %v1901 = vmul.f32 %v1883, %v1817
        %v1902 = vmul.f32 %v1883, %v1818
        %v1903 = vmul.f32 %v1887, %v1819
        %v1904 = vmul.f32 %v1887, %v1820
        %v1905 = vmul.f32 %v1891, %v1821
        %v1906 = vmul.f32 %v1891, %v1822
        %v1907 = vmul.f32 %v1895, %v1823
        %v1908 = vmul.f32 %v1895, %v1824
        %v1909 = vadd.f32 %v1746, %v1897
        %v1910 = vadd.f32 %v1747, %v1898
        %v1911 = vadd.f32 %v1748, %v1899
        %v1912 = vadd.f32 %v1749, %v1900
        %v1913 = vadd.f32 %v1750, %v1901
        %v1914 = vadd.f32 %v1751, %v1902
        %v1915 = vadd.f32 %v1752, %v1903
        %v1916 = vadd.f32 %v1753, %v1904
        %v1917 = vadd.f32 %v1754, %v1905
        %v1918 = vadd.f32 %v1755, %v1906
        %v1919 = vadd.f32 %v1756, %v1907
        %v1920 = vadd.f32 %v1757, %v1908
        %v1921 = vld [vmem:[%s7] sm:$0xff]
        %v1922 = vld [vmem:[%s7 + $0x8] sm:$0xff]
        %v1923 = vld [vmem:[%s7 + $0x10] sm:$0xff]
        %v1924 = vld [vmem:[%s7 + $0x18] sm:$0xff]
        %v1925 = vld [vmem:[%s7 + $0x20] sm:$0xff]
        %v1926 = vld [vmem:[%s7 + $0x28] sm:$0xff]
        %v1927 = vld [vmem:[%s8] sm:$0xff]
        %v1928 = vld [vmem:[%s8 + $0x8] sm:$0xff]
        %v1929 = vld [vmem:[%s8 + $0x10] sm:$0xff]
        %v1930 = vld [vmem:[%s8 + $0x18] sm:$0xff]
        %v1931 = vld [vmem:[%s8 + $0x20] sm:$0xff]
        %v1932 = vld [vmem:[%s8 + $0x28] sm:$0xff]
        %v1933 = vld [vmem:[%s6] sm:$0xff]
        %v1934 = vld [vmem:[%s6 + $0x8] sm:$0xff]
        %v1935 = vld [vmem:[%s6 + $0x10] sm:$0xff]
        %v1936 = vld [vmem:[%s6 + $0x18] sm:$0xff]
        %v1937 = vld [vmem:[%s6 + $0x20] sm:$0xff]
        %v1938 = vld [vmem:[%s6 + $0x28] sm:$0xff]
        %v1939 = vld [vmem:[%s6 + $0x30] sm:$0xff]
        %v1940 = vld [vmem:[%s6 + $0x38] sm:$0xff]
        %v1941 = vld [vmem:[%s6 + $0x40] sm:$0xff]
        %v1942 = vld [vmem:[%s6 + $0x48] sm:$0xff]
        %v1943 = vld [vmem:[%s6 + $0x50] sm:$0xff]
        %v1944 = vld [vmem:[%s6 + $0x58] sm:$0xff]
        %vm1945 = vcmask 195584
        %v1947 = vsel %vm1945, %v1927, 0
        %v1950 = vsel %vm1945, %v1928, 0
        %v1953 = vsel %vm1945, %v1929, 0
        %v1956 = vsel %vm1945, %v1930, 0
        %v1959 = vsel %vm1945, %v1931, 0
        %v1962 = vsel %vm1945, %v1932, 0
        %1964 = vmatprep.subr.mxu0 %v1910
        %1965 = vmatpush1.msra.mxu0 %v1909
        %1966 = vmatprep.subr.mxu0 %v1912
        %1967 = vmatpush1.msra.mxu0 %v1911
        %1968 = vmatprep.subr.mxu0 %v1914
        %1969 = vmatpush1.msra.mxu0 %v1913
        %1970 = vmatprep.subr.mxu0 0.0
        %1971 = vmatpush1.msra.mxu0 0.0
        %1972 = vmatprep.subr.mxu0 0.0
        %1973 = vmatpush1.msra.mxu0 0.0
        %1974 = vmatprep.subr.mxu0 0.0
        %1975 = vmatpush1.msra.mxu0 0.0
        %1976 = vmatprep.subr.mxu0 0.0
        %1977 = vmatpush1.msra.mxu0 0.0
        %1978 = vmatprep.subr.mxu0 0.0
        %1979 = vmatpush1.msra.mxu0 0.0
        %1980 = vmatprep.subr.mxu0 0.0
        %1981 = vmatpush1.msra.mxu0 0.0
        %1982 = vmatprep.subr.mxu0 0.0
        %1983 = vmatpush1.msra.mxu0 0.0
        %1984 = vmatprep.subr.mxu0 0.0
        %1985 = vmatpush1.msra.mxu0 0.0
        %1986 = vmatprep.subr.mxu0 0.0
        %1987 = vmatpush1.msra.mxu0 0.0
        %1988 = vmatprep.subr.mxu0 0.0
        %1989 = vmatpush1.msra.mxu0 0.0
        %1990 = vmatprep.subr.mxu0 0.0
        %1991 = vmatpush1.msra.mxu0 0.0
        %1992 = vmatprep.subr.mxu0 0.0
        %1993 = vmatpush1.msra.mxu0 0.0
        %1994 = vmatprep.subr.mxu0 0.0
        %1995 = vmatpush1.msra.mxu0 0.0
        %1996 = vmatprep.subr.mxu0 0.0
        %1997 = vmatpush1.msra.mxu0 0.0
        %1998 = vmatprep.subr.mxu0 0.0
        %1999 = vmatpush1.msra.mxu0 0.0
        %2000 = vmatprep.subr.mxu0 0.0
        %2001 = vmatpush1.msra.mxu0 0.0
        %2002 = vmatprep.subr.mxu0 0.0
        %2003 = vmatpush1.msra.mxu0 0.0
        %2004 = vmatprep.subr.mxu0 0.0
        %2005 = vmatpush1.msra.mxu0 0.0
        %2006 = vmatprep.subr.mxu0 0.0
        %2007 = vmatpush1.msra.mxu0 0.0
        %2008 = vmatprep.subr.mxu0 0.0
        %2009 = vmatpush1.msra.mxu0 0.0
        %2010 = vmatprep.subr.mxu0 0.0
        %2011 = vmatpush1.msra.mxu0 0.0
        %2012 = vmatprep.subr.mxu0 0.0
        %2013 = vmatpush1.msra.mxu0 0.0
        %2014 = vmatprep.subr.mxu0 0.0
        %2015 = vmatpush1.msra.mxu0 0.0
        %2016 = vmatprep.subr.mxu0 0.0
        %2017 = vmatpush1.msra.mxu0 0.0
        %2018 = vmatprep.subr.mxu0 0.0
        %2019 = vmatpush1.msra.mxu0 0.0
        %2020 = vmatprep.subr.mxu0 0.0
        %2021 = vmatpush1.msra.mxu0 0.0
        %2022 = vmatprep.subr.mxu0 0.0
        %2023 = vmatpush1.msra.mxu0 0.0
        %2024 = vmatprep.subr.mxu0 0.0
        %2025 = vmatpush1.msra.mxu0 0.0
        %2026 = vmatprep.subr.mxu0 0.0
        %2027 = vmatpush1.msra.mxu0 0.0
        %2028 = vmatprep.mubr.f32.mxu0 0.0
        %2029 = vmatmul.mubr.f32.gmra.mrb[0].mxu0 %v1947
        %v2030 = vpop.f32.mrb[0].mxu0
        %v2031 = vadd.f32 0.0, %v2030
        %v2032 = vpop.f32.mrb[0].mxu0
        %v2033 = vadd.f32 0.0, %v2032
        %2034 = vmatprep.mubr.f32.mxu0 0.0
        %2035 = vmatmul.mubr.f32.gmra.mrb[0].mxu0 %v1950
        %v2036 = vpop.f32.mrb[0].mxu0
        %v2037 = vadd.f32 0.0, %v2036
        %v2038 = vpop.f32.mrb[0].mxu0
        %v2039 = vadd.f32 0.0, %v2038
        %2040 = vmatprep.mubr.f32.mxu0 0.0
        %2041 = vmatmul.mubr.f32.gmra.mrb[0].mxu0 %v1953
        %v2042 = vpop.f32.mrb[0].mxu0
        %v2043 = vadd.f32 0.0, %v2042
        %v2044 = vpop.f32.mrb[0].mxu0
        %v2045 = vadd.f32 0.0, %v2044
        %2046 = vmatprep.mubr.f32.mxu0 0.0
        %2047 = vmatmul.mubr.f32.gmra.mrb[0].mxu0 %v1956
        %v2048 = vpop.f32.mrb[0].mxu0
        %v2049 = vadd.f32 0.0, %v2048
        %v2050 = vpop.f32.mrb[0].mxu0
        %v2051 = vadd.f32 0.0, %v2050
        %2052 = vmatprep.mubr.f32.mxu0 0.0
        %2053 = vmatmul.mubr.f32.gmra.mrb[0].mxu0 %v1959
        %v2054 = vpop.f32.mrb[0].mxu0
        %v2055 = vadd.f32 0.0, %v2054
        %v2056 = vpop.f32.mrb[0].mxu0
        %v2057 = vadd.f32 0.0, %v2056
        %2058 = vmatprep.mubr.f32.mxu0 0.0
        %2059 = vmatmul.mubr.f32.gmra.mrb[0].mxu0 %v1962
        %v2060 = vpop.f32.mrb[0].mxu0
        %v2061 = vadd.f32 0.0, %v2060
        %v2062 = vpop.f32.mrb[0].mxu0
        %v2063 = vadd.f32 0.0, %v2062
        %2064 = vdwg.mxu0
        %v2066 = vsel %vm1945, %v1921, 0
        %v2069 = vsel %vm1945, %v1922, 0
        %v2072 = vsel %vm1945, %v1923, 0
        %v2075 = vsel %vm1945, %v1924, 0
        %v2078 = vsel %vm1945, %v1925, 0
        %v2081 = vsel %vm1945, %v1926, 0
        %2083 = vmatprep.subr.mxu0 %v1862
        %2084 = vmatpush1.msra.mxu0 %v1861
        %2085 = vmatprep.subr.mxu0 %v1864
        %2086 = vmatpush1.msra.mxu0 %v1863
        %2087 = vmatprep.subr.mxu0 %v1866
        %2088 = vmatpush1.msra.mxu0 %v1865
        %2089 = vmatprep.subr.mxu0 0.0
        %2090 = vmatpush1.msra.mxu0 0.0
        %2091 = vmatprep.subr.mxu0 0.0
        %2092 = vmatpush1.msra.mxu0 0.0
        %2093 = vmatprep.subr.mxu0 0.0
        %2094 = vmatpush1.msra.mxu0 0.0
        %2095 = vmatprep.subr.mxu0 0.0
        %2096 = vmatpush1.msra.mxu0 0.0
        %2097 = vmatprep.subr.mxu0 0.0
        %2098 = vmatpush1.msra.mxu0 0.0
        %2099 = vmatprep.subr.mxu0 0.0
        %2100 = vmatpush1.msra.mxu0 0.0
        %2101 = vmatprep.subr.mxu0 0.0
        %2102 = vmatpush1.msra.mxu0 0.0
        %2103 = vmatprep.subr.mxu0 0.0
        %2104 = vmatpush1.msra.mxu0 0.0
        %2105 = vmatprep.subr.mxu0 0.0
        %2106 = vmatpush1.msra.mxu0 0.0
        %2107 = vmatprep.subr.mxu0 0.0
        %2108 = vmatpush1.msra.mxu0 0.0
        %2109 = vmatprep.subr.mxu0 0.0
        %2110 = vmatpush1.msra.mxu0 0.0
        %2111 = vmatprep.subr.mxu0 0.0
        %2112 = vmatpush1.msra.mxu0 0.0
        %2113 = vmatprep.subr.mxu0 0.0
        %2114 = vmatpush1.msra.mxu0 0.0
        %2115 = vmatprep.subr.mxu0 0.0
        %2116 = vmatpush1.msra.mxu0 0.0
        %2117 = vmatprep.subr.mxu0 0.0
        %2118 = vmatpush1.msra.mxu0 0.0
        %2119 = vmatprep.subr.mxu0 0.0
        %2120 = vmatpush1.msra.mxu0 0.0
        %2121 = vmatprep.subr.mxu0 0.0
        %2122 = vmatpush1.msra.mxu0 0.0
        %2123 = vmatprep.subr.mxu0 0.0
        %2124 = vmatpush1.msra.mxu0 0.0
        %2125 = vmatprep.subr.mxu0 0.0
        %2126 = vmatpush1.msra.mxu0 0.0
        %2127 = vmatprep.subr.mxu0 0.0
        %2128 = vmatpush1.msra.mxu0 0.0
        %2129 = vmatprep.subr.mxu0 0.0
        %2130 = vmatpush1.msra.mxu0 0.0
        %2131 = vmatprep.subr.mxu0 0.0
        %2132 = vmatpush1.msra.mxu0 0.0
        %2133 = vmatprep.subr.mxu0 0.0
        %2134 = vmatpush1.msra.mxu0 0.0
        %2135 = vmatprep.subr.mxu0 0.0
        %2136 = vmatpush1.msra.mxu0 0.0
        %2137 = vmatprep.subr.mxu0 0.0
        %2138 = vmatpush1.msra.mxu0 0.0
        %2139 = vmatprep.subr.mxu0 0.0
        %2140 = vmatpush1.msra.mxu0 0.0
        %2141 = vmatprep.subr.mxu0 0.0
        %2142 = vmatpush1.msra.mxu0 0.0
        %2143 = vmatprep.subr.mxu0 0.0
        %2144 = vmatpush1.msra.mxu0 0.0
        %2145 = vmatprep.subr.mxu0 0.0
        %2146 = vmatpush1.msra.mxu0 0.0
        %2147 = vmatprep.mubr.f32.mxu0 0.0
        %2148 = vmatmul.mubr.f32.gmra.mrb[0].mxu0 %v2066
        %v2149 = vpop.f32.mrb[0].mxu0
        %v2150 = vadd.f32 %v2031, %v2149
        %v2151 = vpop.f32.mrb[0].mxu0
        %v2152 = vadd.f32 %v2033, %v2151
        %2153 = vmatprep.mubr.f32.mxu0 0.0
        %2154 = vmatmul.mubr.f32.gmra.mrb[0].mxu0 %v2069
        %v2155 = vpop.f32.mrb[0].mxu0
        %v2156 = vadd.f32 %v2037, %v2155
        %v2157 = vpop.f32.mrb[0].mxu0
        %v2158 = vadd.f32 %v2039, %v2157
        %2159 = vmatprep.mubr.f32.mxu0 0.0
        %2160 = vmatmul.mubr.f32.gmra.mrb[0].mxu0 %v2072
        %v2161 = vpop.f32.mrb[0].mxu0
        %v2162 = vadd.f32 %v2043, %v2161
        %v2163 = vpop.f32.mrb[0].mxu0
        %v2164 = vadd.f32 %v2045, %v2163
        %2165 = vmatprep.mubr.f32.mxu0 0.0
        %2166 = vmatmul.mubr.f32.gmra.mrb[0].mxu0 %v2075
        %v2167 = vpop.f32.mrb[0].mxu0
        %v2168 = vadd.f32 %v2049, %v2167
        %v2169 = vpop.f32.mrb[0].mxu0
        %v2170 = vadd.f32 %v2051, %v2169
        %2171 = vmatprep.mubr.f32.mxu0 0.0
        %2172 = vmatmul.mubr.f32.gmra.mrb[0].mxu0 %v2078
        %v2173 = vpop.f32.mrb[0].mxu0
        %v2174 = vadd.f32 %v2055, %v2173
        %v2175 = vpop.f32.mrb[0].mxu0
        %v2176 = vadd.f32 %v2057, %v2175
        %2177 = vmatprep.mubr.f32.mxu0 0.0
        %2178 = vmatmul.mubr.f32.gmra.mrb[0].mxu0 %v2081
        %v2179 = vpop.f32.mrb[0].mxu0
        %v2180 = vadd.f32 %v2061, %v2179
        %v2181 = vpop.f32.mrb[0].mxu0
        %v2182 = vadd.f32 %v2063, %v2181
        %2183 = vdwg.mxu0
        %2185 = vset.pattern.permute.xlu0 0
        %2186 = vperm.xlu0 %2185, %v1933
        %v2187 = vpop.permute.xlu0 %2186
        %2190 = vset.pattern.permute.xlu0 0
        %2191 = vperm.xlu0 %2190, %v1934
        %v2192 = vpop.permute.xlu0 %2191
        %2195 = vset.pattern.permute.xlu0 0
        %2196 = vperm.xlu0 %2195, %v1935
        %v2197 = vpop.permute.xlu0 %2196
        %2200 = vset.pattern.permute.xlu0 0
        %2201 = vperm.xlu0 %2200, %v1936
        %v2202 = vpop.permute.xlu0 %2201
        %2205 = vset.pattern.permute.xlu0 0
        %2206 = vperm.xlu0 %2205, %v1937
        %v2207 = vpop.permute.xlu0 %2206
        %2210 = vset.pattern.permute.xlu0 0
        %2211 = vperm.xlu0 %2210, %v1938
        %v2212 = vpop.permute.xlu0 %2211
        %v2214 = vadd.f32 %v2150, %v2187
        %v2215 = vadd.f32 %v2152, %v2187
        %v2216 = vadd.f32 %v2156, %v2192
        %v2217 = vadd.f32 %v2158, %v2192
        %v2218 = vadd.f32 %v2162, %v2197
        %v2219 = vadd.f32 %v2164, %v2197
        %v2220 = vadd.f32 %v2168, %v2202
        %v2221 = vadd.f32 %v2170, %v2202
        %v2222 = vadd.f32 %v2174, %v2207
        %v2223 = vadd.f32 %v2176, %v2207
        %v2224 = vadd.f32 %v2180, %v2212
        %v2225 = vadd.f32 %v2182, %v2212
        %2226 = vmatprep.subr.mxu0 %v1916
        %2227 = vmatpush1.msra.mxu0 %v1915
        %2228 = vmatprep.subr.mxu0 %v1918
        %2229 = vmatpush1.msra.mxu0 %v1917
        %2230 = vmatprep.subr.mxu0 %v1920
        %2231 = vmatpush1.msra.mxu0 %v1919
        %2232 = vmatprep.subr.mxu0 0.0
        %2233 = vmatpush1.msra.mxu0 0.0
        %2234 = vmatprep.subr.mxu0 0.0
        %2235 = vmatpush1.msra.mxu0 0.0
        %2236 = vmatprep.subr.mxu0 0.0
        %2237 = vmatpush1.msra.mxu0 0.0
        %2238 = vmatprep.subr.mxu0 0.0
        %2239 = vmatpush1.msra.mxu0 0.0
        %2240 = vmatprep.subr.mxu0 0.0
        %2241 = vmatpush1.msra.mxu0 0.0
        %2242 = vmatprep.subr.mxu0 0.0
        %2243 = vmatpush1.msra.mxu0 0.0
        %2244 = vmatprep.subr.mxu0 0.0
        %2245 = vmatpush1.msra.mxu0 0.0
        %2246 = vmatprep.subr.mxu0 0.0
        %2247 = vmatpush1.msra.mxu0 0.0
        %2248 = vmatprep.subr.mxu0 0.0
        %2249 = vmatpush1.msra.mxu0 0.0
        %2250 = vmatprep.subr.mxu0 0.0
        %2251 = vmatpush1.msra.mxu0 0.0
        %2252 = vmatprep.subr.mxu0 0.0
        %2253 = vmatpush1.msra.mxu0 0.0
        %2254 = vmatprep.subr.mxu0 0.0
        %2255 = vmatpush1.msra.mxu0 0.0
        %2256 = vmatprep.subr.mxu0 0.0
        %2257 = vmatpush1.msra.mxu0 0.0
        %2258 = vmatprep.subr.mxu0 0.0
        %2259 = vmatpush1.msra.mxu0 0.0
        %2260 = vmatprep.subr.mxu0 0.0
        %2261 = vmatpush1.msra.mxu0 0.0
        %2262 = vmatprep.subr.mxu0 0.0
        %2263 = vmatpush1.msra.mxu0 0.0
        %2264 = vmatprep.subr.mxu0 0.0
        %2265 = vmatpush1.msra.mxu0 0.0
        %2266 = vmatprep.subr.mxu0 0.0
        %2267 = vmatpush1.msra.mxu0 0.0
        %2268 = vmatprep.subr.mxu0 0.0
        %2269 = vmatpush1.msra.mxu0 0.0
        %2270 = vmatprep.subr.mxu0 0.0
        %2271 = vmatpush1.msra.mxu0 0.0
        %2272 = vmatprep.subr.mxu0 0.0
        %2273 = vmatpush1.msra.mxu0 0.0
        %2274 = vmatprep.subr.mxu0 0.0
        %2275 = vmatpush1.msra.mxu0 0.0
        %2276 = vmatprep.subr.mxu0 0.0
        %2277 = vmatpush1.msra.mxu0 0.0
        %2278 = vmatprep.subr.mxu0 0.0
        %2279 = vmatpush1.msra.mxu0 0.0
        %2280 = vmatprep.subr.mxu0 0.0
        %2281 = vmatpush1.msra.mxu0 0.0
        %2282 = vmatprep.subr.mxu0 0.0
        %2283 = vmatpush1.msra.mxu0 0.0
        %2284 = vmatprep.subr.mxu0 0.0
        %2285 = vmatpush1.msra.mxu0 0.0
        %2286 = vmatprep.subr.mxu0 0.0
        %2287 = vmatpush1.msra.mxu0 0.0
        %2288 = vmatprep.subr.mxu0 0.0
        %2289 = vmatpush1.msra.mxu0 0.0
        %2290 = vmatprep.mubr.f32.mxu0 0.0
        %2291 = vmatmul.mubr.f32.gmra.mrb[0].mxu0 %v1947
        %v2292 = vpop.f32.mrb[0].mxu0
        %v2293 = vadd.f32 0.0, %v2292
        %v2294 = vpop.f32.mrb[0].mxu0
        %v2295 = vadd.f32 0.0, %v2294
        %2296 = vmatprep.mubr.f32.mxu0 0.0
        %2297 = vmatmul.mubr.f32.gmra.mrb[0].mxu0 %v1950
        %v2298 = vpop.f32.mrb[0].mxu0
        %v2299 = vadd.f32 0.0, %v2298
        %v2300 = vpop.f32.mrb[0].mxu0
        %v2301 = vadd.f32 0.0, %v2300
        %2302 = vmatprep.mubr.f32.mxu0 0.0
        %2303 = vmatmul.mubr.f32.gmra.mrb[0].mxu0 %v1953
        %v2304 = vpop.f32.mrb[0].mxu0
        %v2305 = vadd.f32 0.0, %v2304
        %v2306 = vpop.f32.mrb[0].mxu0
        %v2307 = vadd.f32 0.0, %v2306
        %2308 = vmatprep.mubr.f32.mxu0 0.0
        %2309 = vmatmul.mubr.f32.gmra.mrb[0].mxu0 %v1956
        %v2310 = vpop.f32.mrb[0].mxu0
        %v2311 = vadd.f32 0.0, %v2310
        %v2312 = vpop.f32.mrb[0].mxu0
        %v2313 = vadd.f32 0.0, %v2312
        %2314 = vmatprep.mubr.f32.mxu0 0.0
        %2315 = vmatmul.mubr.f32.gmra.mrb[0].mxu0 %v1959
        %v2316 = vpop.f32.mrb[0].mxu0
        %v2317 = vadd.f32 0.0, %v2316
        %v2318 = vpop.f32.mrb[0].mxu0
        %v2319 = vadd.f32 0.0, %v2318
        %2320 = vmatprep.mubr.f32.mxu0 0.0
        %2321 = vmatmul.mubr.f32.gmra.mrb[0].mxu0 %v1962
        %v2322 = vpop.f32.mrb[0].mxu0
        %v2323 = vadd.f32 0.0, %v2322
        %v2324 = vpop.f32.mrb[0].mxu0
        %v2325 = vadd.f32 0.0, %v2324
        %2326 = vdwg.mxu0
        %2327 = vmatprep.subr.mxu0 %v1868
        %2328 = vmatpush1.msra.mxu0 %v1867
        %2329 = vmatprep.subr.mxu0 %v1870
        %2330 = vmatpush1.msra.mxu0 %v1869
        %2331 = vmatprep.subr.mxu0 %v1872
        %2332 = vmatpush1.msra.mxu0 %v1871
        %2333 = vmatprep.subr.mxu0 0.0
        %2334 = vmatpush1.msra.mxu0 0.0
        %2335 = vmatprep.subr.mxu0 0.0
        %2336 = vmatpush1.msra.mxu0 0.0
        %2337 = vmatprep.subr.mxu0 0.0
        %2338 = vmatpush1.msra.mxu0 0.0
        %2339 = vmatprep.subr.mxu0 0.0
        %2340 = vmatpush1.msra.mxu0 0.0
        %2341 = vmatprep.subr.mxu0 0.0
        %2342 = vmatpush1.msra.mxu0 0.0
        %2343 = vmatprep.subr.mxu0 0.0
        %2344 = vmatpush1.msra.mxu0 0.0
        %2345 = vmatprep.subr.mxu0 0.0
        %2346 = vmatpush1.msra.mxu0 0.0
        %2347 = vmatprep.subr.mxu0 0.0
        %2348 = vmatpush1.msra.mxu0 0.0
        %2349 = vmatprep.subr.mxu0 0.0
        %2350 = vmatpush1.msra.mxu0 0.0
        %2351 = vmatprep.subr.mxu0 0.0
        %2352 = vmatpush1.msra.mxu0 0.0
        %2353 = vmatprep.subr.mxu0 0.0
        %2354 = vmatpush1.msra.mxu0 0.0
        %2355 = vmatprep.subr.mxu0 0.0
        %2356 = vmatpush1.msra.mxu0 0.0
        %2357 = vmatprep.subr.mxu0 0.0
        %2358 = vmatpush1.msra.mxu0 0.0
        %2359 = vmatprep.subr.mxu0 0.0
        %2360 = vmatpush1.msra.mxu0 0.0
        %2361 = vmatprep.subr.mxu0 0.0
        %2362 = vmatpush1.msra.mxu0 0.0
        %2363 = vmatprep.subr.mxu0 0.0
        %2364 = vmatpush1.msra.mxu0 0.0
        %2365 = vmatprep.subr.mxu0 0.0
        %2366 = vmatpush1.msra.mxu0 0.0
        %2367 = vmatprep.subr.mxu0 0.0
        %2368 = vmatpush1.msra.mxu0 0.0
        %2369 = vmatprep.subr.mxu0 0.0
        %2370 = vmatpush1.msra.mxu0 0.0
        %2371 = vmatprep.subr.mxu0 0.0
        %2372 = vmatpush1.msra.mxu0 0.0
        %2373 = vmatprep.subr.mxu0 0.0
        %2374 = vmatpush1.msra.mxu0 0.0
        %2375 = vmatprep.subr.mxu0 0.0
        %2376 = vmatpush1.msra.mxu0 0.0
        %2377 = vmatprep.subr.mxu0 0.0
        %2378 = vmatpush1.msra.mxu0 0.0
        %2379 = vmatprep.subr.mxu0 0.0
        %2380 = vmatpush1.msra.mxu0 0.0
        %2381 = vmatprep.subr.mxu0 0.0
        %2382 = vmatpush1.msra.mxu0 0.0
        %2383 = vmatprep.subr.mxu0 0.0
        %2384 = vmatpush1.msra.mxu0 0.0
        %2385 = vmatprep.subr.mxu0 0.0
        %2386 = vmatpush1.msra.mxu0 0.0
        %2387 = vmatprep.subr.mxu0 0.0
        %2388 = vmatpush1.msra.mxu0 0.0
        %2389 = vmatprep.subr.mxu0 0.0
        %2390 = vmatpush1.msra.mxu0 0.0
        %2391 = vmatprep.mubr.f32.mxu0 0.0
        %2392 = vmatmul.mubr.f32.gmra.mrb[0].mxu0 %v2066
        %v2393 = vpop.f32.mrb[0].mxu0
        %v2394 = vadd.f32 %v2293, %v2393
        %v2395 = vpop.f32.mrb[0].mxu0
        %v2396 = vadd.f32 %v2295, %v2395
        %2397 = vmatprep.mubr.f32.mxu0 0.0
        %2398 = vmatmul.mubr.f32.gmra.mrb[0].mxu0 %v2069
        %v2399 = vpop.f32.mrb[0].mxu0
        %v2400 = vadd.f32 %v2299, %v2399
        %v2401 = vpop.f32.mrb[0].mxu0
        %v2402 = vadd.f32 %v2301, %v2401
        %2403 = vmatprep.mubr.f32.mxu0 0.0
        %2404 = vmatmul.mubr.f32.gmra.mrb[0].mxu0 %v2072
        %v2405 = vpop.f32.mrb[0].mxu0
        %v2406 = vadd.f32 %v2305, %v2405
        %v2407 = vpop.f32.mrb[0].mxu0
        %v2408 = vadd.f32 %v2307, %v2407
        %2409 = vmatprep.mubr.f32.mxu0 0.0
        %2410 = vmatmul.mubr.f32.gmra.mrb[0].mxu0 %v2075
        %v2411 = vpop.f32.mrb[0].mxu0
        %v2412 = vadd.f32 %v2311, %v2411
        %v2413 = vpop.f32.mrb[0].mxu0
        %v2414 = vadd.f32 %v2313, %v2413
        %2415 = vmatprep.mubr.f32.mxu0 0.0
        %2416 = vmatmul.mubr.f32.gmra.mrb[0].mxu0 %v2078
        %v2417 = vpop.f32.mrb[0].mxu0
        %v2418 = vadd.f32 %v2317, %v2417
        %v2419 = vpop.f32.mrb[0].mxu0
        %v2420 = vadd.f32 %v2319, %v2419
        %2421 = vmatprep.mubr.f32.mxu0 0.0
        %2422 = vmatmul.mubr.f32.gmra.mrb[0].mxu0 %v2081
        %v2423 = vpop.f32.mrb[0].mxu0
        %v2424 = vadd.f32 %v2323, %v2423
        %v2425 = vpop.f32.mrb[0].mxu0
        %v2426 = vadd.f32 %v2325, %v2425
        %2427 = vdwg.mxu0
        %2429 = vset.pattern.permute.xlu0 0
        %2430 = vperm.xlu0 %2429, %v1939
        %v2431 = vpop.permute.xlu0 %2430
        %2434 = vset.pattern.permute.xlu0 0
        %2435 = vperm.xlu0 %2434, %v1940
        %v2436 = vpop.permute.xlu0 %2435
        %2439 = vset.pattern.permute.xlu0 0
        %2440 = vperm.xlu0 %2439, %v1941
        %v2441 = vpop.permute.xlu0 %2440
        %2444 = vset.pattern.permute.xlu0 0
        %2445 = vperm.xlu0 %2444, %v1942
        %v2446 = vpop.permute.xlu0 %2445
        %2449 = vset.pattern.permute.xlu0 0
        %2450 = vperm.xlu0 %2449, %v1943
        %v2451 = vpop.permute.xlu0 %2450
        %2454 = vset.pattern.permute.xlu0 0
        %2455 = vperm.xlu0 %2454, %v1944
        %v2456 = vpop.permute.xlu0 %2455
        %v2458 = vadd.f32 %v2394, %v2431
        %v2459 = vadd.f32 %v2396, %v2431
        %v2460 = vadd.f32 %v2400, %v2436
        %v2461 = vadd.f32 %v2402, %v2436
        %v2462 = vadd.f32 %v2406, %v2441
        %v2463 = vadd.f32 %v2408, %v2441
        %v2464 = vadd.f32 %v2412, %v2446
        %v2465 = vadd.f32 %v2414, %v2446
        %v2466 = vadd.f32 %v2418, %v2451
        %v2467 = vadd.f32 %v2420, %v2451
        %v2468 = vadd.f32 %v2424, %v2456
        %v2469 = vadd.f32 %v2426, %v2456
        %v2470 = vmax.f32 %v2214, %v2218
        %v2471 = vmax.f32 %v2216, %v2220
        %v2472 = vmax.f32 %v2470, %v2222
        %v2473 = vmax.f32 %v2471, %v2224
        %v2474 = vmax.f32 %v2472, %v2473
        %v2475 = vrot.slane %v2474, 4
        %v2476 = vmax.f32 %v2474, %v2475
        %v2477 = vrot.slane %v2476, 2
        %v2478 = vmax.f32 %v2476, %v2477
        %v2479 = vrot.slane %v2478, 1
        %v2480 = vmax.f32 %v2478, %v2479
        %v2481 = vmax.f32 %v2215, %v2219
        %v2482 = vmax.f32 %v2217, %v2221
        %v2483 = vmax.f32 %v2481, %v2223
        %v2484 = vmax.f32 %v2482, %v2225
        %v2485 = vmax.f32 %v2483, %v2484
        %v2486 = vrot.slane %v2485, 4
        %v2487 = vmax.f32 %v2485, %v2486
        %v2488 = vrot.slane %v2487, 2
        %v2489 = vmax.f32 %v2487, %v2488
        %v2490 = vrot.slane %v2489, 1
        %v2491 = vmax.f32 %v2489, %v2490
        %v2492 = vsub.f32 %v2214, %v2480
        %v2493 = vsub.f32 %v2215, %v2491
        %v2494 = vsub.f32 %v2216, %v2480
        %v2495 = vsub.f32 %v2217, %v2491
        %v2496 = vsub.f32 %v2218, %v2480
        %v2497 = vsub.f32 %v2219, %v2491
        %v2498 = vsub.f32 %v2220, %v2480
        %v2499 = vsub.f32 %v2221, %v2491
        %v2500 = vsub.f32 %v2222, %v2480
        %v2501 = vsub.f32 %v2223, %v2491
        %v2502 = vsub.f32 %v2224, %v2480
        %v2503 = vsub.f32 %v2225, %v2491
        %v2504 = vmul.f32 %v2492, 1.442695
        %v2505 = vpow.pop %v2504
        %v2506 = vmul.f32 %v2493, 1.442695
        %v2507 = vpow.pop %v2506
        %v2508 = vmul.f32 %v2494, 1.442695
        %v2509 = vpow.pop %v2508
        %v2510 = vmul.f32 %v2495, 1.442695
        %v2511 = vpow.pop %v2510
        %v2512 = vmul.f32 %v2496, 1.442695
        %v2513 = vpow.pop %v2512
        %v2514 = vmul.f32 %v2497, 1.442695
        %v2515 = vpow.pop %v2514
        %v2516 = vmul.f32 %v2498, 1.442695
        %v2517 = vpow.pop %v2516
        %v2518 = vmul.f32 %v2499, 1.442695
        %v2519 = vpow.pop %v2518
        %v2520 = vmul.f32 %v2500, 1.442695
        %v2521 = vpow.pop %v2520
        %v2522 = vmul.f32 %v2501, 1.442695
        %v2523 = vpow.pop %v2522
        %v2524 = vmul.f32 %v2502, 1.442695
        %v2525 = vpow.pop %v2524
        %v2526 = vmul.f32 %v2503, 1.442695
        %v2527 = vpow.pop %v2526
        %v2528 = vadd.f32 %v2505, %v2509
        %v2529 = vadd.f32 %v2528, %v2513
        %v2530 = vadd.f32 %v2529, %v2517
        %v2531 = vadd.f32 %v2530, %v2521
        %v2532 = vadd.f32 %v2531, %v2525
        %v2533 = vrot.slane %v2532, 4
        %v2534 = vadd.f32 %v2532, %v2533
        %v2535 = vrot.slane %v2534, 2
        %v2536 = vadd.f32 %v2534, %v2535
        %v2537 = vrot.slane %v2536, 1
        %v2538 = vadd.f32 %v2536, %v2537
        %v2539 = vadd.f32 %v2507, %v2511
        %v2540 = vadd.f32 %v2539, %v2515
        %v2541 = vadd.f32 %v2540, %v2519
        %v2542 = vadd.f32 %v2541, %v2523
        %v2543 = vadd.f32 %v2542, %v2527
        %v2544 = vrot.slane %v2543, 4
        %v2545 = vadd.f32 %v2543, %v2544
        %v2546 = vrot.slane %v2545, 2
        %v2547 = vadd.f32 %v2545, %v2546
        %v2548 = vrot.slane %v2547, 1
        %v2549 = vadd.f32 %v2547, %v2548
        %v2550 = vrcp.pop %v2538
        %v2551 = vrcp.pop %v2549
        %v2552 = vmul.f32 %v2505, %v2550
        %v2553 = vmul.f32 %v2507, %v2551
        %v2554 = vmul.f32 %v2509, %v2550
        %v2555 = vmul.f32 %v2511, %v2551
        %v2556 = vmul.f32 %v2513, %v2550
        %v2557 = vmul.f32 %v2515, %v2551
        %v2558 = vmul.f32 %v2517, %v2550
        %v2559 = vmul.f32 %v2519, %v2551
        %v2560 = vmul.f32 %v2521, %v2550
        %v2561 = vmul.f32 %v2523, %v2551
        %v2562 = vmul.f32 %v2525, %v2550
        %v2563 = vmul.f32 %v2527, %v2551
        %v2564 = vmul.f32 %v2552, %v450
        %v2565 = vmul.f32 %v2553, %v452
        %v2566 = vmul.f32 %v2554, %v454
        %v2567 = vmul.f32 %v2555, %v456
        %v2568 = vmul.f32 %v2556, %v460
        %v2569 = vmul.f32 %v2557, %v462
        %v2570 = vmul.f32 %v2558, %v464
        %v2571 = vmul.f32 %v2559, %v466
        %v2572 = vmul.f32 %v2560, %v470
        %v2573 = vmul.f32 %v2561, %v472
        %v2574 = vmul.f32 %v2562, %v474
        %v2575 = vmul.f32 %v2563, %v476
        %v2576 = vadd.f32 %v2564, %v2458
        %v2577 = vadd.f32 %v2565, %v2459
        %v2578 = vadd.f32 %v2566, %v2460
        %v2579 = vadd.f32 %v2567, %v2461
        %v2580 = vadd.f32 %v2568, %v2462
        %v2581 = vadd.f32 %v2569, %v2463
        %v2582 = vadd.f32 %v2570, %v2464
        %v2583 = vadd.f32 %v2571, %v2465
        %v2584 = vadd.f32 %v2572, %v2466
        %v2585 = vadd.f32 %v2573, %v2467
        %v2586 = vadd.f32 %v2574, %v2468
        %v2587 = vadd.f32 %v2575, %v2469
        %2588 = vst [vmem:[%s325] sm:$0xff] %v2576
        %2589 = vst [vmem:[%s325 + $0x8] sm:$0xff] %v2577
        %2590 = vst [vmem:[%s325 + $0x10] sm:$0xff] %v2578
        %2591 = vst [vmem:[%s325 + $0x18] sm:$0xff] %v2579
        %2592 = vst [vmem:[%s325 + $0x20] sm:$0xff] %v2580
        %2593 = vst [vmem:[%s325 + $0x28] sm:$0xff] %v2581
        %2594 = vst [vmem:[%s325 + $0x30] sm:$0xff] %v2582
        %2595 = vst [vmem:[%s325 + $0x38] sm:$0xff] %v2583
        %2596 = vst [vmem:[%s325 + $0x40] sm:$0xff] %v2584
        %2597 = vst [vmem:[%s325 + $0x48] sm:$0xff] %v2585
        %2598 = vst [vmem:[%s325 + $0x50] sm:$0xff] %v2586
        %2599 = vst [vmem:[%s325 + $0x58] sm:$0xff] %v2587
        %s2600 = sand.u32 %s225, 1
        %s2601 = scalar_lea.sflag [#allocation3], %s2600
        %s2602 = sand.u32 %s225, 1
        %s2603 = smul.addr %s2602, 96
        %s2604 = scalar_lea.vmem [#allocation2], %s2603
        // Predicated region
        $region57: #{tpu_custom_call.1} parent=55 // pred_check
          %p2605 = pneg %p235
        $region58: #{tpu_custom_call.1} parent=55 // pred_check_branch
          %2607 = sbr.rel (%p2605) target = $region60
        $region59: #{tpu_custom_call.1} parent=55 // pred_region
          %s2609 = ssub.s32 1536, 1536
          %2610 = vsyncadd %s2601, %s2609
          %s2611 = smul.addr %s23, 12
          %s2612 = smul.addr %s2611, 128
          %s2613 = scalar_lea.hbm %s9, %s2612
          %s2614 = sshll.u32 %s2604, 4
          %s2615 = int_to_ptr.vmem [resolvable:$true] %s2614
          %2620 = dma.vmem_to_hbm [thread:$0]  %s2615, 1536, %s2613, %s2601, 256, 256, 16
        $region60: #{tpu_custom_call.1} parent=55 // pred_fallthru
          _
      $region56: #{tpu_custom_call.1} parent=5 // pred_fallthru
        _
      %p2621 = scmp.le.s32.totalorder 2, %s18
      // Predicated region
      $region61: #{tpu_custom_call.1} parent=5 // pred_check
        %p2622 = pneg %p2621
      $region62: #{tpu_custom_call.1} parent=5 // pred_check_branch
        %2624 = sbr.rel (%p2622) target = $region64
      $region63: #{tpu_custom_call.1} parent=5 // pred_region
        %s2625 = ssub.s32 %s18, 2
        // Predicated region
        $region65: #{tpu_custom_call.1} parent=63 // pred_check
          %p2626 = pneg %p241
        $region66: #{tpu_custom_call.1} parent=63 // pred_check_branch
          %2628 = sbr.rel (%p2626) target = $region68
        $region67: #{tpu_custom_call.1} parent=63 // pred_region
          %s2629 = sand.u32 %s226, 1
          %s2630 = scalar_lea.sflag [#allocation3], %s2629
          %s2631 = sand.u32 %s226, 1
          %s2632 = smul.addr %s2631, 96
          %s2633 = scalar_lea.vmem [#allocation2], %s2632
          %2634 = dma.done %s2630, 1536
        $region68: #{tpu_custom_call.1} parent=63 // pred_fallthru
          _
      $region64: #{tpu_custom_call.1} parent=5 // pred_fallthru
        _
    $region6: #{tpu_custom_call.1} parent=1 // loop_footer
      %s22 = sadd.s32 1, %s18
    $region7: #{tpu_custom_call.1} parent=1 // loop_footer_branch
      %17 = sbr.rel target = $region3
    $region8: #{tpu_custom_call.1} parent=1 // loop_exit
      _
    %2635 = vsyncpa [#allocation3], 1
    %s2636 = scalar_lea.sflag [#allocation3], 1
    %2637 = vsyncpa %s2636, 1

</llo_original>
